<compile_context>
chip_gen: v7x
topology: tpu7x:2x2x1
jax: 0.10.0
libtpu: 0.0.40
codegen_flags: <defaults>
</compile_context>

<pallas_src>
import functools
import math

import jax
import jax.numpy as jnp
from jax.experimental import pallas as pl
from jax.experimental.pallas import tpu as pltpu

_VMEM_LIMIT = 64 * 1024 * 1024


def _round_up(n, m):
    return ((n + m - 1) // m) * m


# ----------------------------------------------------------------------------- matmul (+bias, +relu)
def _matmul_bias_kernel(x_ref, w_ref, b_ref, o_ref, *, relu):
    acc = jnp.dot(x_ref[...], w_ref[...], preferred_element_type=jnp.float32)
    acc = acc + b_ref[...].astype(jnp.float32)
    if relu:
        acc = jnp.maximum(acc, 0.0)
    o_ref[...] = acc.astype(o_ref.dtype)


def linear_rows(x2d, w, b, *, relu=False, row_tile=512):
    """(M, K) @ (K, N) + b, row-tiled. Used for 1x1 convs and im2col'd causal convs."""
    M, K = x2d.shape
    N = w.shape[1]
    tm = min(row_tile, _round_up(M, 8))
    Mp = _round_up(M, tm)
    if Mp != M:
        x2d = jnp.pad(x2d, ((0, Mp - M), (0, 0)))
    out = pl.pallas_call(
        functools.partial(_matmul_bias_kernel, relu=relu),
        out_shape=jax.ShapeDtypeStruct((Mp, N), x2d.dtype),
        grid_spec=pltpu.PrefetchScalarGridSpec(
            num_scalar_prefetch=0,
            grid=(Mp // tm,),
            in_specs=[
                pl.BlockSpec((tm, K), lambda i: (i, 0)),
                pl.BlockSpec((K, N), lambda i: (0, 0)),   # weights stay resident
                pl.BlockSpec((1, N), lambda i: (0, 0)),
            ],
            out_specs=pl.BlockSpec((tm, N), lambda i: (i, 0)),
        ),
        compiler_params=pltpu.CompilerParams(
            dimension_semantics=("parallel",),
            vmem_limit_bytes=_VMEM_LIMIT,
        ),
    )(x2d, w, b.reshape(1, N))
    return out[:M]


# ----------------------------------------------------------------------------- fused residual + LayerNorm
def _add_layernorm_kernel(x_ref, y_ref, g_ref, b_ref, o_ref, *, eps, inv_c):
    s = x_ref[...].astype(jnp.float32) + y_ref[...].astype(jnp.float32)
    row_sum = jnp.sum(s, axis=-1, keepdims=True)          # single pass over resident data:
    row_sq = jnp.sum(s * s, axis=-1, keepdims=True)       # sum and sum-of-squares back to back
    mean = row_sum * inv_c
    var = jnp.maximum(row_sq * inv_c - mean * mean, 0.0)
    inv = jax.lax.rsqrt(var + eps)
    y = (s - mean) * inv
    o_ref[...] = (y * g_ref[...] + b_ref[...]).astype(o_ref.dtype)


def add_layernorm_rows(x2d, y2d, gamma, beta, *, eps=1e-5, row_tile=1024):
    """LayerNorm(x + y) over the last (channel) axis; rows tiled with a cdiv-padded grid."""
    M, C = x2d.shape
    tm = min(row_tile, _round_up(M, 8))
    Mp = _round_up(M, tm)
    if Mp != M:
        pad = ((0, Mp - M), (0, 0))
        x2d = jnp.pad(x2d, pad)
        y2d = jnp.pad(y2d, pad)
    out = pl.pallas_call(
        functools.partial(_add_layernorm_kernel, eps=eps, inv_c=1.0 / C),
        out_shape=jax.ShapeDtypeStruct((Mp, C), x2d.dtype),
        grid_spec=pltpu.PrefetchScalarGridSpec(
            num_scalar_prefetch=0,
            grid=(Mp // tm,),
            in_specs=[
                pl.BlockSpec((tm, C), lambda i: (i, 0)),
                pl.BlockSpec((tm, C), lambda i: (i, 0)),
                pl.BlockSpec((1, C), lambda i: (0, 0)),
                pl.BlockSpec((1, C), lambda i: (0, 0)),
            ],
            out_specs=pl.BlockSpec((tm, C), lambda i: (i, 0)),
        ),
        compiler_params=pltpu.CompilerParams(
            dimension_semantics=("parallel",),
            vmem_limit_bytes=_VMEM_LIMIT,
        ),
    )(x2d, y2d, gamma.reshape(1, C).astype(jnp.float32),
      beta.reshape(1, C).astype(jnp.float32))
    return out[:M]


# ----------------------------------------------------------------------------- fused causal multi-head attention
def _mha_causal_kernel(q_ref, k_ref, v_ref, o_ref, *, n_heads, scale, neg_fill):
    q = q_ref[0].astype(jnp.float32)     # (T, C)
    k = k_ref[0].astype(jnp.float32)
    v = v_ref[0].astype(jnp.float32)
    t, c = q.shape
    dh = c // n_heads
    row = jax.lax.broadcasted_iota(jnp.int32, (t, t), 0)
    col = jax.lax.broadcasted_iota(jnp.int32, (t, t), 1)
    causal = col <= row                                  # subsequent_mask
    outs = []
    for h in range(n_heads):                             # static unroll; slices stay in VMEM/vregs
        sl = slice(h * dh, (h + 1) * dh)
        qh = q[:, sl] * scale
        s = jax.lax.dot_general(qh, k[:, sl], (((1,), (1,)), ((), ())),
                                preferred_element_type=jnp.float32)
        s = jnp.where(causal, s, neg_fill)               # masked_fill(mask == 0, -1e4)
        m = jnp.max(s, axis=-1, keepdims=True)
        p = jnp.exp(s - m)
        p = p / jnp.sum(p, axis=-1, keepdims=True)
        outs.append(jnp.dot(p, v[:, sl], preferred_element_type=jnp.float32))
    o_ref[0] = jnp.concatenate(outs, axis=-1).astype(o_ref.dtype)


def mha_causal(q, k, v, *, n_heads):
    """q, k, v: (B, T, C) channels-last. Fused causal multi-head attention, one batch per grid step."""
    # TODO(synk): for very long T this holds full (T, T) scores per head in VMEM; flash-style
    # k/v tiling with online softmax would be needed for long sequences.
    B, T, C = q.shape
    dh = C // n_heads
    kernel = functools.partial(_mha_causal_kernel, n_heads=n_heads,
                               scale=1.0 / math.sqrt(dh), neg_fill=-1e4)
    return pl.pallas_call(
        kernel,
        out_shape=jax.ShapeDtypeStruct((B, T, C), q.dtype),
        grid_spec=pltpu.PrefetchScalarGridSpec(
            num_scalar_prefetch=0,
            grid=(B,),
            in_specs=[
                pl.BlockSpec((1, T, C), lambda b: (b, 0, 0)),
                pl.BlockSpec((1, T, C), lambda b: (b, 0, 0)),
                pl.BlockSpec((1, T, C), lambda b: (b, 0, 0)),
            ],
            out_specs=pl.BlockSpec((1, T, C), lambda b: (b, 0, 0)),
        ),
        compiler_params=pltpu.CompilerParams(
            dimension_semantics=("parallel",),
            vmem_limit_bytes=_VMEM_LIMIT,
        ),
    )(q, k, v)


# ----------------------------------------------------------------------------- FFT forward (g=None path)
def _causal_frames(h, kernel_size):
    """h: (B, T, C) -> (B*T, kernel_size*C) im2col frames with causal (left) padding."""
    B, T, C = h.shape
    if kernel_size == 1:
        return h.reshape(B * T, C)
    hp = jnp.pad(h, ((0, 0), (kernel_size - 1, 0), (0, 0)))
    taps = [hp[:, j:j + T, :] for j in range(kernel_size)]
    return jnp.concatenate(taps, axis=-1).reshape(B * T, kernel_size * C)


def fft_forward(x, x_mask, layers, *, n_heads, kernel_size, eps=1e-5):
    """x: (B, C, T), x_mask: (B, 1, T). Matches FFT.forward with g=None (eval mode)."""
    B, C, T = x.shape
    # Channels-last ONCE for the whole stack (instead of per-LayerNorm transposes).
    xt = jnp.transpose(x, (0, 2, 1))            # (B, T, C)
    mt = jnp.transpose(x_mask, (0, 2, 1))       # (B, T, 1)
    xt = xt * mt
    for p in layers:
        rows = xt.reshape(B * T, C)
        # --- self attention: 1x1 conv projections + fused causal MHA + output projection ---
        q = linear_rows(rows, p["Wq"], p["bq"]).reshape(B, T, C)
        k = linear_rows(rows, p["Wk"], p["bk"]).reshape(B, T, C)
        v = linear_rows(rows, p["Wv"], p["bv"]).reshape(B, T, C)
        a = mha_causal(q, k, v, n_heads=n_heads).reshape(B * T, C)
        y = linear_rows(a, p["Wo"], p["bo"])
        # TODO(synk): dropout layers are identity (p_dropout=0 / eval mode).
        rows = add_layernorm_rows(rows, y, p["g0"], p["be0"], eps=eps)
        # --- FFN: causal Conv1d -> relu -> causal Conv1d, gated by x_mask ---
        h = rows.reshape(B, T, C) * mt
        h = linear_rows(_causal_frames(h, kernel_size),
                        p["W1"].reshape(kernel_size * C, -1), p["b1"], relu=True)
        F_ch = h.shape[-1]
        h = h.reshape(B, T, F_ch) * mt
        h = linear_rows(_causal_frames(h, kernel_size),
                        p["W2"].reshape(kernel_size * F_ch, -1), p["b2"])
        y = (h.reshape(B, T, C) * mt).reshape(B * T, C)
        rows = add_layernorm_rows(rows, y, p["g1"], p["be1"], eps=eps)
        xt = rows.reshape(B, T, C)
    xt = xt * mt
    return jnp.transpose(xt, (0, 2, 1))


# ----------------------------------------------------------------------------- params + pure-JAX reference
def init_params(key, *, channels, filter_channels, kernel_size, n_layers):
    layers = []
    for _ in range(n_layers):
        key, *ks = jax.random.split(key, 11)

        def wmat(k, shape, fan_in):
            return jax.random.normal(k, shape, jnp.float32) / math.sqrt(fan_in)

        Wq = wmat(ks[0], (channels, channels), channels)
        bq = 0.1 * jax.random.normal(ks[1], (channels,), jnp.float32)
        layers.append(dict(
            Wq=Wq, bq=bq,
            Wk=Wq, bk=bq,                      # proximal_init=True: conv_k copies conv_q
            Wv=wmat(ks[2], (channels, channels), channels),
            bv=0.1 * jax.random.normal(ks[3], (channels,), jnp.float32),
            Wo=wmat(ks[4], (channels, channels), channels),
            bo=0.1 * jax.random.normal(ks[5], (channels,), jnp.float32),
            g0=jnp.ones((channels,), jnp.float32),
            be0=jnp.zeros((channels,), jnp.float32),
            W1=wmat(ks[6], (kernel_size, channels, filter_channels), kernel_size * channels),
            b1=0.1 * jax.random.normal(ks[7], (filter_channels,), jnp.float32),
            W2=wmat(ks[8], (kernel_size, filter_channels, channels), kernel_size * filter_channels),
            b2=0.1 * jax.random.normal(ks[9], (channels,), jnp.float32),
            g1=jnp.ones((channels,), jnp.float32),
            be1=jnp.zeros((channels,), jnp.float32),
        ))
    return layers


def _layer_norm_ref(x, gamma, beta, eps):
    mean = jnp.mean(x, axis=-1, keepdims=True)
    var = jnp.mean((x - mean) ** 2, axis=-1, keepdims=True)
    return (x - mean) / jnp.sqrt(var + eps) * gamma + beta


def _causal_conv_ref(h, W, b, prec):
    B, T, _ = h.shape
    K = W.shape[0]
    hp = jnp.pad(h, ((0, 0), (K - 1, 0), (0, 0)))
    acc = jnp.zeros((B, T, W.shape[2]), jnp.float32)
    for j in range(K):
        acc = acc + jnp.einsum("btc,cf->btf", hp[:, j:j + T, :], W[j], precision=prec)
    return acc + b


def reference_forward(x, x_mask, layers, *, n_heads, kernel_size, eps=1e-5):
    prec = jax.lax.Precision.HIGHEST
    B, C, T = x.shape
    dh = C // n_heads
    mt = jnp.transpose(x_mask, (0, 2, 1))
    xt = jnp.transpose(x, (0, 2, 1)) * mt
    causal = jnp.tril(jnp.ones((T, T), jnp.float32))
    for p in layers:
        q = jnp.einsum("btc,cd->btd", xt, p["Wq"], precision=prec) + p["bq"]
        k = jnp.einsum("btc,cd->btd", xt, p["Wk"], precision=prec) + p["bk"]
        v = jnp.einsum("btc,cd->btd", xt, p["Wv"], precision=prec) + p["bv"]
        qh = q.reshape(B, T, n_heads, dh).transpose(0, 2, 1, 3)
        kh = k.reshape(B, T, n_heads, dh).transpose(0, 2, 1, 3)
        vh = v.reshape(B, T, n_heads, dh).transpose(0, 2, 1, 3)
        s = jnp.einsum("bhqd,bhkd->bhqk", qh / math.sqrt(dh), kh, precision=prec)
        s = jnp.where(causal == 0, -1e4, s)
        pa = jax.nn.softmax(s, axis=-1)
        o = jnp.einsum("bhqk,bhkd->bhqd", pa, vh, precision=prec)
        o = o.transpose(0, 2, 1, 3).reshape(B, T, C)
        y = jnp.einsum("btc,cd->btd", o, p["Wo"], precision=prec) + p["bo"]
        xt = _layer_norm_ref(xt + y, p["g0"], p["be0"], eps)
        h = xt * mt
        h = jnp.maximum(_causal_conv_ref(h, p["W1"], p["b1"], prec), 0.0)
        h = h * mt
        h = _causal_conv_ref(h, p["W2"], p["b2"], prec)
        y = h * mt
        xt = _layer_norm_ref(xt + y, p["g1"], p["be1"], eps)
    xt = xt * mt
    return jnp.transpose(xt, (0, 2, 1))


if __name__ == "__main__":
    B, C, T = 2, 32, 16
    n_heads = 2
    filter_channels = 64
    kernel_size = 3
    n_layers = 2
    eps = 1e-5

    key = jax.random.PRNGKey(0)
    kx, kp = jax.random.split(key)
    x = jax.random.normal(kx, (B, C, T), dtype=jnp.float32)
    lengths = jnp.array([T, T - 4], dtype=jnp.int32)
    x_mask = (jnp.arange(T)[None, :] < lengths[:, None]).astype(jnp.float32)[:, None, :]

    layers = init_params(kp, channels=C, filter_channels=filter_channels,
                         kernel_size=kernel_size, n_layers=n_layers)

    run = jax.jit(functools.partial(fft_forward, n_heads=n_heads,
                                    kernel_size=kernel_size, eps=eps))
    out = jax.block_until_ready(run(x, x_mask, layers))

    ref = reference_forward(x, x_mask, layers, n_heads=n_heads,
                            kernel_size=kernel_size, eps=eps)
    assert out.shape == (B, C, T)
    # Loose tolerance: MXU f32 matmul pass decomposition may differ slightly from the
    # HIGHEST-precision XLA reference across TPU generations.
    assert jnp.allclose(out, ref, atol=3e-2, rtol=3e-2), float(jnp.max(jnp.abs(out - ref)))

    print("KERNEL_OK")
</pallas_src>

<mosaic_0001>
module attributes {stable_mosaic.version = 11 : i64} {
  func.func @_add_layernorm_kernel(%arg0: i32, %arg1: memref<32x32xf32, #tpu.memory_space<vmem>>, %arg2: memref<32x32xf32, #tpu.memory_space<vmem>>, %arg3: memref<1x32xf32, #tpu.memory_space<vmem>>, %arg4: memref<1x32xf32, #tpu.memory_space<vmem>>, %arg5: memref<32x32xf32, #tpu.memory_space<vmem>>) attributes {dimension_semantics = [#tpu.dimension_semantics<parallel>], iteration_bounds = array<i64: 1>, scalar_prefetch = 0 : i64, scratch_operands = 0 : i64, tpu.core_type = #tpu.core_type<tc>, window_params = [{transform_indices = @transform_0, window_bounds = array<i64: 32, 32>}, {transform_indices = @transform_1, window_bounds = array<i64: 32, 32>}, {pipeline_mode = #tpu.pipeline_mode<synchronous>, transform_indices = @transform_2, window_bounds = array<i64: 1, 32>}, {pipeline_mode = #tpu.pipeline_mode<synchronous>, transform_indices = @transform_3, window_bounds = array<i64: 1, 32>}, {transform_indices = @transform_4, window_bounds = array<i64: 32, 32>}]} {
    %c0 = arith.constant 0 : index
    %c0_0 = arith.constant 0 : index
    %0 = vector.load %arg1[%c0, %c0_0] : memref<32x32xf32, #tpu.memory_space<vmem>>, vector<32x32xf32>
    %c0_1 = arith.constant 0 : index
    %c0_2 = arith.constant 0 : index
    %1 = vector.load %arg2[%c0_1, %c0_2] : memref<32x32xf32, #tpu.memory_space<vmem>>, vector<32x32xf32>
    %2 = arith.addf %0, %1 : vector<32x32xf32>
    %cst = arith.constant dense<0.000000e+00> : vector<32xf32>
    %3 = vector.multi_reduction <add>, %2, %cst [1] : vector<32x32xf32> to vector<32xf32>
    %4 = vector.shape_cast %3 : vector<32xf32> to vector<32x1xf32>
    %5 = arith.mulf %2, %2 : vector<32x32xf32>
    %cst_3 = arith.constant dense<0.000000e+00> : vector<32xf32>
    %6 = vector.multi_reduction <add>, %5, %cst_3 [1] : vector<32x32xf32> to vector<32xf32>
    %7 = vector.shape_cast %6 : vector<32xf32> to vector<32x1xf32>
    %cst_4 = arith.constant 3.125000e-02 : f32
    %8 = vector.broadcast %cst_4 : f32 to vector<32x1xf32>
    %9 = arith.mulf %4, %8 : vector<32x1xf32>
    %cst_5 = arith.constant 3.125000e-02 : f32
    %10 = vector.broadcast %cst_5 : f32 to vector<32x1xf32>
    %11 = arith.mulf %7, %10 : vector<32x1xf32>
    %12 = arith.mulf %9, %9 : vector<32x1xf32>
    %13 = arith.subf %11, %12 : vector<32x1xf32>
    %cst_6 = arith.constant 0.000000e+00 : f32
    %14 = vector.broadcast %cst_6 : f32 to vector<32x1xf32>
    %15 = arith.maximumf %13, %14 : vector<32x1xf32>
    %cst_7 = arith.constant 9.99999974E-6 : f32
    %16 = vector.broadcast %cst_7 : f32 to vector<32x1xf32>
    %17 = arith.addf %15, %16 : vector<32x1xf32>
    %18 = math.rsqrt %17 : vector<32x1xf32>
    %19 = vector.broadcast %9 : vector<32x1xf32> to vector<32x32xf32>
    %20 = arith.subf %2, %19 : vector<32x32xf32>
    %21 = vector.broadcast %18 : vector<32x1xf32> to vector<32x32xf32>
    %22 = arith.mulf %20, %21 : vector<32x32xf32>
    %c0_8 = arith.constant 0 : index
    %c0_9 = arith.constant 0 : index
    %23 = vector.load %arg3[%c0_8, %c0_9] : memref<1x32xf32, #tpu.memory_space<vmem>>, vector<1x32xf32>
    %24 = vector.broadcast %23 : vector<1x32xf32> to vector<32x32xf32>
    %25 = arith.mulf %22, %24 : vector<32x32xf32>
    %c0_10 = arith.constant 0 : index
    %c0_11 = arith.constant 0 : index
    %26 = vector.load %arg4[%c0_10, %c0_11] : memref<1x32xf32, #tpu.memory_space<vmem>>, vector<1x32xf32>
    %27 = vector.broadcast %26 : vector<1x32xf32> to vector<32x32xf32>
    %28 = arith.addf %25, %27 : vector<32x32xf32>
    %c0_12 = arith.constant 0 : index
    %c0_13 = arith.constant 0 : index
    %29 = vector.load %arg5[%c0_12, %c0_13] : memref<32x32xf32, #tpu.memory_space<vmem>>, vector<32x32xf32>
    tpu.vector_store %arg5[%c0_12, %c0_13], %28 {strides = array<i32>} : memref<32x32xf32, #tpu.memory_space<vmem>>, vector<32x32xf32>,
    return
  }
  func.func @transform_0(%arg0: i32) -> (i32, i32) {
    %c0_i32 = arith.constant 0 : i32
    %c0_i32_0 = arith.constant 0 : i32
    return %arg0, %c0_i32 : i32, i32
  }
  func.func @transform_1(%arg0: i32) -> (i32, i32) {
    %c0_i32 = arith.constant 0 : i32
    %c0_i32_0 = arith.constant 0 : i32
    return %arg0, %c0_i32 : i32, i32
  }
  func.func @transform_2(%arg0: i32) -> (i32, i32) {
    %c0_i32 = arith.constant 0 : i32
    %c0_i32_0 = arith.constant 0 : i32
    %c0_i32_1 = arith.constant 0 : i32
    return %c0_i32, %c0_i32_0 : i32, i32
  }
  func.func @transform_3(%arg0: i32) -> (i32, i32) {
    %c0_i32 = arith.constant 0 : i32
    %c0_i32_0 = arith.constant 0 : i32
    %c0_i32_1 = arith.constant 0 : i32
    return %c0_i32, %c0_i32_0 : i32, i32
  }
  func.func @transform_4(%arg0: i32) -> (i32, i32) {
    %c0_i32 = arith.constant 0 : i32
    %c0_i32_0 = arith.constant 0 : i32
    return %arg0, %c0_i32 : i32, i32
  }
}

module attributes {stable_mosaic.version = 11 : i64} {
  func.func @_matmul_bias_kernel(%arg0: i32, %arg1: memref<32x32xf32, #tpu.memory_space<vmem>>, %arg2: memref<32x32xf32, #tpu.memory_space<vmem>>, %arg3: memref<1x32xf32, #tpu.memory_space<vmem>>, %arg4: memref<32x32xf32, #tpu.memory_space<vmem>>) attributes {dimension_semantics = [#tpu.dimension_semantics<parallel>], iteration_bounds = array<i64: 1>, scalar_prefetch = 0 : i64, scratch_operands = 0 : i64, tpu.core_type = #tpu.core_type<tc>, window_params = [{transform_indices = @transform_0, window_bounds = array<i64: 32, 32>}, {pipeline_mode = #tpu.pipeline_mode<synchronous>, transform_indices = @transform_1, window_bounds = array<i64: 32, 32>}, {pipeline_mode = #tpu.pipeline_mode<synchronous>, transform_indices = @transform_2, window_bounds = array<i64: 1, 32>}, {transform_indices = @transform_3, window_bounds = array<i64: 32, 32>}]} {
    %c0 = arith.constant 0 : index
    %c0_0 = arith.constant 0 : index
    %0 = vector.load %arg1[%c0, %c0_0] : memref<32x32xf32, #tpu.memory_space<vmem>>, vector<32x32xf32>
    %c0_1 = arith.constant 0 : index
    %c0_2 = arith.constant 0 : index
    %1 = vector.load %arg2[%c0_1, %c0_2] : memref<32x32xf32, #tpu.memory_space<vmem>>, vector<32x32xf32>
    %cst = arith.constant dense<0.000000e+00> : vector<32x32xf32>
    %2 = tpu.matmul %0, %1, %cst {dimension_numbers = #tpu.dot_dimension_numbers<[1], [0], [0], [1], [0, 0, 1, 1], [], []>} : vector<32x32xf32>, vector<32x32xf32>, vector<32x32xf32> -> vector<32x32xf32>
    %c0_3 = arith.constant 0 : index
    %c0_4 = arith.constant 0 : index
    %3 = vector.load %arg3[%c0_3, %c0_4] : memref<1x32xf32, #tpu.memory_space<vmem>>, vector<1x32xf32>
    %4 = vector.broadcast %3 : vector<1x32xf32> to vector<32x32xf32>
    %5 = arith.addf %2, %4 : vector<32x32xf32>
    %c0_5 = arith.constant 0 : index
    %c0_6 = arith.constant 0 : index
    %6 = vector.load %arg4[%c0_5, %c0_6] : memref<32x32xf32, #tpu.memory_space<vmem>>, vector<32x32xf32>
    tpu.vector_store %arg4[%c0_5, %c0_6], %5 {strides = array<i32>} : memref<32x32xf32, #tpu.memory_space<vmem>>, vector<32x32xf32>,
    return
  }
  func.func @transform_0(%arg0: i32) -> (i32, i32) {
    %c0_i32 = arith.constant 0 : i32
    %c0_i32_0 = arith.constant 0 : i32
    return %arg0, %c0_i32 : i32, i32
  }
  func.func @transform_1(%arg0: i32) -> (i32, i32) {
    %c0_i32 = arith.constant 0 : i32
    %c0_i32_0 = arith.constant 0 : i32
    %c0_i32_1 = arith.constant 0 : i32
    return %c0_i32, %c0_i32_0 : i32, i32
  }
  func.func @transform_2(%arg0: i32) -> (i32, i32) {
    %c0_i32 = arith.constant 0 : i32
    %c0_i32_0 = arith.constant 0 : i32
    %c0_i32_1 = arith.constant 0 : i32
    return %c0_i32, %c0_i32_0 : i32, i32
  }
  func.func @transform_3(%arg0: i32) -> (i32, i32) {
    %c0_i32 = arith.constant 0 : i32
    %c0_i32_0 = arith.constant 0 : i32
    return %arg0, %c0_i32 : i32, i32
  }
}

module attributes {stable_mosaic.version = 11 : i64} {
  func.func @_mha_causal_kernel(%arg0: i32, %arg1: memref<1x16x32xf32, #tpu.memory_space<vmem>>, %arg2: memref<1x16x32xf32, #tpu.memory_space<vmem>>, %arg3: memref<1x16x32xf32, #tpu.memory_space<vmem>>, %arg4: memref<1x16x32xf32, #tpu.memory_space<vmem>>) attributes {dimension_semantics = [#tpu.dimension_semantics<parallel>], iteration_bounds = array<i64: 2>, scalar_prefetch = 0 : i64, scratch_operands = 0 : i64, tpu.core_type = #tpu.core_type<tc>, window_params = [{transform_indices = @transform_0, window_bounds = array<i64: 1, 16, 32>}, {transform_indices = @transform_1, window_bounds = array<i64: 1, 16, 32>}, {transform_indices = @transform_2, window_bounds = array<i64: 1, 16, 32>}, {transform_indices = @transform_3, window_bounds = array<i64: 1, 16, 32>}]} {
    %c0 = arith.constant 0 : index
    %c0_0 = arith.constant 0 : index
    %c0_1 = arith.constant 0 : index
    %0 = vector.load %arg1[%c0, %c0_0, %c0_1] : memref<1x16x32xf32, #tpu.memory_space<vmem>>, vector<1x16x32xf32>
    %1 = vector.shape_cast %0 : vector<1x16x32xf32> to vector<16x32xf32>
    %c0_2 = arith.constant 0 : index
    %c0_3 = arith.constant 0 : index
    %c0_4 = arith.constant 0 : index
    %2 = vector.load %arg2[%c0_2, %c0_3, %c0_4] : memref<1x16x32xf32, #tpu.memory_space<vmem>>, vector<1x16x32xf32>
    %3 = vector.shape_cast %2 : vector<1x16x32xf32> to vector<16x32xf32>
    %c0_5 = arith.constant 0 : index
    %c0_6 = arith.constant 0 : index
    %c0_7 = arith.constant 0 : index
    %4 = vector.load %arg3[%c0_5, %c0_6, %c0_7] : memref<1x16x32xf32, #tpu.memory_space<vmem>>, vector<1x16x32xf32>
    %5 = vector.shape_cast %4 : vector<1x16x32xf32> to vector<16x32xf32>
    %6 = tpu.iota {dimensions = array<i32: 0>} : vector<16x16xi32>
    %7 = tpu.iota {dimensions = array<i32: 1>} : vector<16x16xi32>
    %8 = arith.cmpi sle, %7, %6 : vector<16x16xi32>
    %9 = vector.extract_strided_slice %1 {offsets = [0, 0], sizes = [16, 16], strides = [1, 1]} : vector<16x32xf32> to vector<16x16xf32>
    %cst = arith.constant 2.500000e-01 : f32
    %10 = vector.broadcast %cst : f32 to vector<16x16xf32>
    %11 = arith.mulf %9, %10 : vector<16x16xf32>
    %12 = vector.extract_strided_slice %3 {offsets = [0, 0], sizes = [16, 16], strides = [1, 1]} : vector<16x32xf32> to vector<16x16xf32>
    %cst_8 = arith.constant dense<0.000000e+00> : vector<16x16xf32>
    %13 = tpu.matmul %11, %12, %cst_8 {dimension_numbers = #tpu.dot_dimension_numbers<[1], [1], [0], [0], [0, 0, 1, 0], [], []>} : vector<16x16xf32>, vector<16x16xf32>, vector<16x16xf32> -> vector<16x16xf32>
    %cst_9 = arith.constant -1.000000e+04 : f32
    %14 = vector.broadcast %cst_9 : f32 to vector<16x16xf32>
    %15 = arith.select %8, %13, %14 : vector<16x16xi1>, vector<16x16xf32>
    %cst_10 = arith.constant dense<0xFF800000> : vector<16xf32>
    %16 = vector.multi_reduction <maximumf>, %15, %cst_10 [1] : vector<16x16xf32> to vector<16xf32>
    %17 = vector.shape_cast %16 : vector<16xf32> to vector<16x1xf32>
    %18 = vector.broadcast %17 : vector<16x1xf32> to vector<16x16xf32>
    %19 = arith.subf %15, %18 : vector<16x16xf32>
    %20 = math.exp %19 : vector<16x16xf32>
    %cst_11 = arith.constant dense<0.000000e+00> : vector<16xf32>
    %21 = vector.multi_reduction <add>, %20, %cst_11 [1] : vector<16x16xf32> to vector<16xf32>
    %22 = vector.shape_cast %21 : vector<16xf32> to vector<16x1xf32>
    %23 = vector.broadcast %22 : vector<16x1xf32> to vector<16x16xf32>
    %24 = arith.divf %20, %23 : vector<16x16xf32>
    %25 = vector.extract_strided_slice %5 {offsets = [0, 0], sizes = [16, 16], strides = [1, 1]} : vector<16x32xf32> to vector<16x16xf32>
    %cst_12 = arith.constant dense<0.000000e+00> : vector<16x16xf32>
    %26 = tpu.matmul %24, %25, %cst_12 {dimension_numbers = #tpu.dot_dimension_numbers<[1], [0], [0], [1], [0, 0, 1, 1], [], []>} : vector<16x16xf32>, vector<16x16xf32>, vector<16x16xf32> -> vector<16x16xf32>
    %27 = vector.extract_strided_slice %1 {offsets = [0, 16], sizes = [16, 16], strides = [1, 1]} : vector<16x32xf32> to vector<16x16xf32>
    %cst_13 = arith.constant 2.500000e-01 : f32
    %28 = vector.broadcast %cst_13 : f32 to vector<16x16xf32>
    %29 = arith.mulf %27, %28 : vector<16x16xf32>
    %30 = vector.extract_strided_slice %3 {offsets = [0, 16], sizes = [16, 16], strides = [1, 1]} : vector<16x32xf32> to vector<16x16xf32>
    %cst_14 = arith.constant dense<0.000000e+00> : vector<16x16xf32>
    %31 = tpu.matmul %29, %30, %cst_14 {dimension_numbers = #tpu.dot_dimension_numbers<[1], [1], [0], [0], [0, 0, 1, 0], [], []>} : vector<16x16xf32>, vector<16x16xf32>, vector<16x16xf32> -> vector<16x16xf32>
    %cst_15 = arith.constant -1.000000e+04 : f32
    %32 = vector.broadcast %cst_15 : f32 to vector<16x16xf32>
    %33 = arith.select %8, %31, %32 : vector<16x16xi1>, vector<16x16xf32>
    %cst_16 = arith.constant dense<0xFF800000> : vector<16xf32>
    %34 = vector.multi_reduction <maximumf>, %33, %cst_16 [1] : vector<16x16xf32> to vector<16xf32>
    %35 = vector.shape_cast %34 : vector<16xf32> to vector<16x1xf32>
    %36 = vector.broadcast %35 : vector<16x1xf32> to vector<16x16xf32>
    %37 = arith.subf %33, %36 : vector<16x16xf32>
    %38 = math.exp %37 : vector<16x16xf32>
    %cst_17 = arith.constant dense<0.000000e+00> : vector<16xf32>
    %39 = vector.multi_reduction <add>, %38, %cst_17 [1] : vector<16x16xf32> to vector<16xf32>
    %40 = vector.shape_cast %39 : vector<16xf32> to vector<16x1xf32>
    %41 = vector.broadcast %40 : vector<16x1xf32> to vector<16x16xf32>
    %42 = arith.divf %38, %41 : vector<16x16xf32>
    %43 = vector.extract_strided_slice %5 {offsets = [0, 16], sizes = [16, 16], strides = [1, 1]} : vector<16x32xf32> to vector<16x16xf32>
    %cst_18 = arith.constant dense<0.000000e+00> : vector<16x16xf32>
    %44 = tpu.matmul %42, %43, %cst_18 {dimension_numbers = #tpu.dot_dimension_numbers<[1], [0], [0], [1], [0, 0, 1, 1], [], []>} : vector<16x16xf32>, vector<16x16xf32>, vector<16x16xf32> -> vector<16x16xf32>
    %45 = tpu.concatenate %26, %44 in 1 : vector<16x16xf32>, vector<16x16xf32> -> vector<16x32xf32>
    %c0_19 = arith.constant 0 : index
    %c0_20 = arith.constant 0 : index
    %c0_21 = arith.constant 0 : index
    %46 = vector.load %arg4[%c0_19, %c0_20, %c0_21] : memref<1x16x32xf32, #tpu.memory_space<vmem>>, vector<1x16x32xf32>
    %47 = vector.shape_cast %46 : vector<1x16x32xf32> to vector<16x32xf32>
    %48 = vector.shape_cast %45 : vector<16x32xf32> to vector<1x16x32xf32>
    tpu.vector_store %arg4[%c0_19, %c0_20, %c0_21], %48 {strides = array<i32>} : memref<1x16x32xf32, #tpu.memory_space<vmem>>, vector<1x16x32xf32>,
    return
  }
  func.func @transform_0(%arg0: i32) -> (i32, i32, i32) {
    %c0_i32 = arith.constant 0 : i32
    %c0_i32_0 = arith.constant 0 : i32
    %c0_i32_1 = arith.constant 0 : i32
    return %arg0, %c0_i32, %c0_i32_0 : i32, i32, i32
  }
  func.func @transform_1(%arg0: i32) -> (i32, i32, i32) {
    %c0_i32 = arith.constant 0 : i32
    %c0_i32_0 = arith.constant 0 : i32
    %c0_i32_1 = arith.constant 0 : i32
    return %arg0, %c0_i32, %c0_i32_0 : i32, i32, i32
  }
  func.func @transform_2(%arg0: i32) -> (i32, i32, i32) {
    %c0_i32 = arith.constant 0 : i32
    %c0_i32_0 = arith.constant 0 : i32
    %c0_i32_1 = arith.constant 0 : i32
    return %arg0, %c0_i32, %c0_i32_0 : i32, i32, i32
  }
  func.func @transform_3(%arg0: i32) -> (i32, i32, i32) {
    %c0_i32 = arith.constant 0 : i32
    %c0_i32_0 = arith.constant 0 : i32
    %c0_i32_1 = arith.constant 0 : i32
    return %arg0, %c0_i32, %c0_i32_0 : i32, i32, i32
  }
}

module attributes {stable_mosaic.version = 11 : i64} {
  func.func @_matmul_bias_kernel(%arg0: i32, %arg1: memref<32x96xf32, #tpu.memory_space<vmem>>, %arg2: memref<96x64xf32, #tpu.memory_space<vmem>>, %arg3: memref<1x64xf32, #tpu.memory_space<vmem>>, %arg4: memref<32x64xf32, #tpu.memory_space<vmem>>) attributes {dimension_semantics = [#tpu.dimension_semantics<parallel>], iteration_bounds = array<i64: 1>, scalar_prefetch = 0 : i64, scratch_operands = 0 : i64, tpu.core_type = #tpu.core_type<tc>, window_params = [{transform_indices = @transform_0, window_bounds = array<i64: 32, 96>}, {pipeline_mode = #tpu.pipeline_mode<synchronous>, transform_indices = @transform_1, window_bounds = array<i64: 96, 64>}, {pipeline_mode = #tpu.pipeline_mode<synchronous>, transform_indices = @transform_2, window_bounds = array<i64: 1, 64>}, {transform_indices = @transform_3, window_bounds = array<i64: 32, 64>}]} {
    %c0 = arith.constant 0 : index
    %c0_0 = arith.constant 0 : index
    %0 = vector.load %arg1[%c0, %c0_0] : memref<32x96xf32, #tpu.memory_space<vmem>>, vector<32x96xf32>
    %c0_1 = arith.constant 0 : index
    %c0_2 = arith.constant 0 : index
    %1 = vector.load %arg2[%c0_1, %c0_2] : memref<96x64xf32, #tpu.memory_space<vmem>>, vector<96x64xf32>
    %cst = arith.constant dense<0.000000e+00> : vector<32x64xf32>
    %2 = tpu.matmul %0, %1, %cst {dimension_numbers = #tpu.dot_dimension_numbers<[1], [0], [0], [1], [0, 0, 1, 1], [], []>} : vector<32x96xf32>, vector<96x64xf32>, vector<32x64xf32> -> vector<32x64xf32>
    %c0_3 = arith.constant 0 : index
    %c0_4 = arith.constant 0 : index
    %3 = vector.load %arg3[%c0_3, %c0_4] : memref<1x64xf32, #tpu.memory_space<vmem>>, vector<1x64xf32>
    %4 = vector.broadcast %3 : vector<1x64xf32> to vector<32x64xf32>
    %5 = arith.addf %2, %4 : vector<32x64xf32>
    %cst_5 = arith.constant 0.000000e+00 : f32
    %6 = vector.broadcast %cst_5 : f32 to vector<32x64xf32>
    %7 = arith.maximumf %5, %6 : vector<32x64xf32>
    %c0_6 = arith.constant 0 : index
    %c0_7 = arith.constant 0 : index
    %8 = vector.load %arg4[%c0_6, %c0_7] : memref<32x64xf32, #tpu.memory_space<vmem>>, vector<32x64xf32>
    tpu.vector_store %arg4[%c0_6, %c0_7], %7 {strides = array<i32>} : memref<32x64xf32, #tpu.memory_space<vmem>>, vector<32x64xf32>,
    return
  }
  func.func @transform_0(%arg0: i32) -> (i32, i32) {
    %c0_i32 = arith.constant 0 : i32
    %c0_i32_0 = arith.constant 0 : i32
    return %arg0, %c0_i32 : i32, i32
  }
  func.func @transform_1(%arg0: i32) -> (i32, i32) {
    %c0_i32 = arith.constant 0 : i32
    %c0_i32_0 = arith.constant 0 : i32
    %c0_i32_1 = arith.constant 0 : i32
    return %c0_i32, %c0_i32_0 : i32, i32
  }
  func.func @transform_2(%arg0: i32) -> (i32, i32) {
    %c0_i32 = arith.constant 0 : i32
    %c0_i32_0 = arith.constant 0 : i32
    %c0_i32_1 = arith.constant 0 : i32
    return %c0_i32, %c0_i32_0 : i32, i32
  }
  func.func @transform_3(%arg0: i32) -> (i32, i32) {
    %c0_i32 = arith.constant 0 : i32
    %c0_i32_0 = arith.constant 0 : i32
    return %arg0, %c0_i32 : i32, i32
  }
}

module attributes {stable_mosaic.version = 11 : i64} {
  func.func @_matmul_bias_kernel(%arg0: i32, %arg1: memref<32x192xf32, #tpu.memory_space<vmem>>, %arg2: memref<192x32xf32, #tpu.memory_space<vmem>>, %arg3: memref<1x32xf32, #tpu.memory_space<vmem>>, %arg4: memref<32x32xf32, #tpu.memory_space<vmem>>) attributes {dimension_semantics = [#tpu.dimension_semantics<parallel>], iteration_bounds = array<i64: 1>, scalar_prefetch = 0 : i64, scratch_operands = 0 : i64, tpu.core_type = #tpu.core_type<tc>, window_params = [{transform_indices = @transform_0, window_bounds = array<i64: 32, 192>}, {pipeline_mode = #tpu.pipeline_mode<synchronous>, transform_indices = @transform_1, window_bounds = array<i64: 192, 32>}, {pipeline_mode = #tpu.pipeline_mode<synchronous>, transform_indices = @transform_2, window_bounds = array<i64: 1, 32>}, {transform_indices = @transform_3, window_bounds = array<i64: 32, 32>}]} {
    %c0 = arith.constant 0 : index
    %c0_0 = arith.constant 0 : index
    %0 = vector.load %arg1[%c0, %c0_0] : memref<32x192xf32, #tpu.memory_space<vmem>>, vector<32x192xf32>
    %c0_1 = arith.constant 0 : index
    %c0_2 = arith.constant 0 : index
    %1 = vector.load %arg2[%c0_1, %c0_2] : memref<192x32xf32, #tpu.memory_space<vmem>>, vector<192x32xf32>
    %cst = arith.constant dense<0.000000e+00> : vector<32x32xf32>
    %2 = tpu.matmul %0, %1, %cst {dimension_numbers = #tpu.dot_dimension_numbers<[1], [0], [0], [1], [0, 0, 1, 1], [], []>} : vector<32x192xf32>, vector<192x32xf32>, vector<32x32xf32> -> vector<32x32xf32>
    %c0_3 = arith.constant 0 : index
    %c0_4 = arith.constant 0 : index
    %3 = vector.load %arg3[%c0_3, %c0_4] : memref<1x32xf32, #tpu.memory_space<vmem>>, vector<1x32xf32>
    %4 = vector.broadcast %3 : vector<1x32xf32> to vector<32x32xf32>
    %5 = arith.addf %2, %4 : vector<32x32xf32>
    %c0_5 = arith.constant 0 : index
    %c0_6 = arith.constant 0 : index
    %6 = vector.load %arg4[%c0_5, %c0_6] : memref<32x32xf32, #tpu.memory_space<vmem>>, vector<32x32xf32>
    tpu.vector_store %arg4[%c0_5, %c0_6], %5 {strides = array<i32>} : memref<32x32xf32, #tpu.memory_space<vmem>>, vector<32x32xf32>,
    return
  }
  func.func @transform_0(%arg0: i32) -> (i32, i32) {
    %c0_i32 = arith.constant 0 : i32
    %c0_i32_0 = arith.constant 0 : i32
    return %arg0, %c0_i32 : i32, i32
  }
  func.func @transform_1(%arg0: i32) -> (i32, i32) {
    %c0_i32 = arith.constant 0 : i32
    %c0_i32_0 = arith.constant 0 : i32
    %c0_i32_1 = arith.constant 0 : i32
    return %c0_i32, %c0_i32_0 : i32, i32
  }
  func.func @transform_2(%arg0: i32) -> (i32, i32) {
    %c0_i32 = arith.constant 0 : i32
    %c0_i32_0 = arith.constant 0 : i32
    %c0_i32_1 = arith.constant 0 : i32
    return %c0_i32, %c0_i32_0 : i32, i32
  }
  func.func @transform_3(%arg0: i32) -> (i32, i32) {
    %c0_i32 = arith.constant 0 : i32
    %c0_i32_0 = arith.constant 0 : i32
    return %arg0, %c0_i32 : i32, i32
  }
}

</mosaic_0001>

<llo_original>
// kernel: fft_forward.24
$region0: #{fft_forward.24}
  #allocation0 [shape = 'u32[]', space=smem, size = 0x4, offset = 0x4, fixed_abs, tag = 'smem constant byte address 0x4 - core index']
  #allocation1 [shape = 'u32[144,128]{1,0:T(1,128)}', space=vmem, size = 0x12000, scoped, tag = 'internal scratch']
  %s0 = inlined_call_operand.hbm [shape: f32[32,96], index: 0, kind: input, shape index: {}]
  %s1 = inlined_call_operand.hbm [shape: f32[96,64], index: 1, kind: input, shape index: {}]
  %s2 = inlined_call_operand.hbm [shape: f32[1,64], index: 2, kind: input, shape index: {}]
  %s3 = inlined_call_operand.hbm [shape: f32[32,64], index: 3, kind: output, shape index: {}]
  %s4 = sld [smem:[#allocation0]]
  $region34: #{fft_forward.24} parent=0
    _
  %s6 = ssub.s32 1, %s4
  %s7 = scalar_select 0, %s6, %s4
  $region1: #{fft_forward.24} parent=0
    #allocation2 [shape = 'u8[16384]{0}', space=vmem, size = 0x4000, scoped, tag = 'input window, operand 0, single buffered']
    #allocation3 [shape = 's32[1]{0}', space=sflag, size = 0x4, scoped, tag = 'scoped memory for fft_forward.24']
    #allocation4 [shape = 's32[1]{0}', space=sflag, size = 0x4, scoped, tag = 'scoped memory for fft_forward.24']
    #allocation5 [shape = 'u8[49152]{0}', space=vmem, size = 0xc000, scoped, tag = 'input window, operand 1, single buffered']
    #allocation6 [shape = 's32[1]{0}', space=sflag, size = 0x4, scoped, tag = 'scoped memory for fft_forward.24']
    #allocation7 [shape = 'u8[512]{0}', space=vmem, size = 0x400, scoped, tag = 'input window, operand 2, single buffered']
    #allocation8 [shape = 'u8[16384]{0}', space=vmem, size = 0x4000, scoped, tag = 'output window, operand 0, single buffered']
    %8 = vsyncpa [#allocation3], 0
    %9 = vsyncpa [#allocation6], 0
    %10 = vsyncpa [#allocation4], 0
    // Predicated region
    $region2: #{fft_forward.24} parent=1 // pred_check
      _
    $region3: #{fft_forward.24} parent=1 // pred_check_branch
      %12 = sbr.rel (0) target = $region5
    $region4: #{fft_forward.24} parent=1 // pred_region
      %s14 = ssub.s32 512, 512
      %15 = vsyncadd [#allocation3], %s14
      %s16 = sshll.u32 [#allocation2], 4
      %s17 = int_to_ptr.vmem [resolvable:$true] %s16
      %22 = dma.hbm_to_vmem [thread:$0]  %s0, 512, %s17, [#allocation3], 128, 128, 8
    $region5: #{fft_forward.24} parent=1 // pred_fallthru
      _
    // Predicated region
    $region6: #{fft_forward.24} parent=1 // pred_check
      _
    $region7: #{fft_forward.24} parent=1 // pred_check_branch
      %24 = sbr.rel (0) target = $region9
    $region8: #{fft_forward.24} parent=1 // pred_region
      %s26 = ssub.s32 1536, 1536
      %27 = vsyncadd [#allocation6], %s26
      %s28 = sshll.u32 [#allocation5], 4
      %s29 = int_to_ptr.vmem [resolvable:$true] %s28
      %34 = dma.hbm_to_vmem [thread:$0]  %s1, 1536, %s29, [#allocation6], 128, 128, 8
    $region9: #{fft_forward.24} parent=1 // pred_fallthru
      _
    // Predicated region
    $region10: #{fft_forward.24} parent=1 // pred_check
      _
    $region11: #{fft_forward.24} parent=1 // pred_check_branch
      %36 = sbr.rel (0) target = $region13
    $region12: #{fft_forward.24} parent=1 // pred_region
      %s38 = ssub.s32 16, 16
      %39 = vsyncadd [#allocation6], %s38
      %s41 = sshll.u32 [#allocation7], 4
      %s42 = int_to_ptr.vmem [resolvable:$true] %s41
      %44 = dma.hbm_to_vmem [thread:$0]  %s2, 16, %s42, [#allocation6]
    $region13: #{fft_forward.24} parent=1 // pred_fallthru
      _
    // Predicated region
    $region14: #{fft_forward.24} parent=1 // pred_check
      _
    $region15: #{fft_forward.24} parent=1 // pred_check_branch
      %46 = sbr.rel (0) target = $region17
    $region16: #{fft_forward.24} parent=1 // pred_region
      %47 = dma.done [#allocation3], 512
    $region17: #{fft_forward.24} parent=1 // pred_fallthru
      _
    // Predicated region
    $region18: #{fft_forward.24} parent=1 // pred_check
      _
    $region19: #{fft_forward.24} parent=1 // pred_check_branch
      %49 = sbr.rel (0) target = $region21
    $region20: #{fft_forward.24} parent=1 // pred_region
      %50 = dma.done [#allocation6], 1536
    $region21: #{fft_forward.24} parent=1 // pred_fallthru
      _
    // Predicated region
    $region22: #{fft_forward.24} parent=1 // pred_check
      _
    $region23: #{fft_forward.24} parent=1 // pred_check_branch
      %52 = sbr.rel (0) target = $region25
    $region24: #{fft_forward.24} parent=1 // pred_region
      %53 = dma.done [#allocation6], 16
    $region25: #{fft_forward.24} parent=1 // pred_fallthru
      _
    %v54 = vld [vmem:[#allocation2] sm:$0xff]
    %v55 = vld [vmem:[#allocation2 + $0x8] sm:$0xff]
    %v56 = vld [vmem:[#allocation2 + $0x10] sm:$0xff]
    %v57 = vld [vmem:[#allocation2 + $0x18] sm:$0xff]
    %v58 = vld [vmem:[#allocation5] sm:$0xff]
    %v59 = vld [vmem:[#allocation5 + $0x8] sm:$0xff]
    %v60 = vld [vmem:[#allocation5 + $0x10] sm:$0xff]
    %v61 = vld [vmem:[#allocation5 + $0x18] sm:$0xff]
    %v62 = vld [vmem:[#allocation5 + $0x20] sm:$0xff]
    %v63 = vld [vmem:[#allocation5 + $0x28] sm:$0xff]
    %v64 = vld [vmem:[#allocation5 + $0x30] sm:$0xff]
    %v65 = vld [vmem:[#allocation5 + $0x38] sm:$0xff]
    %v66 = vld [vmem:[#allocation5 + $0x40] sm:$0xff]
    %v67 = vld [vmem:[#allocation5 + $0x48] sm:$0xff]
    %v68 = vld [vmem:[#allocation5 + $0x50] sm:$0xff]
    %v69 = vld [vmem:[#allocation5 + $0x58] sm:$0xff]
    %v70 = vld [vmem:[#allocation7] sm:$0x1]
    %v72 = vlaneseq
    %v73 = vshrl.u32 %v72, 7
    %v74 = vsub.s32 0, %v73
    %v75 = vrot.slane %v70, %v74
    %vm77 = vcmask 785408
    %v79 = vsel %vm77, %v54, 0
    %v82 = vsel %vm77, %v55, 0
    %v85 = vsel %vm77, %v56, 0
    %v88 = vsel %vm77, %v57, 0
    %90 = vmatprep.subr.mxu0 0.0
    %91 = vmatpush1.msra.mxu0 %v58
    %92 = vmatprep.subr.mxu0 0.0
    %93 = vmatpush1.msra.mxu0 %v59
    %94 = vmatprep.subr.mxu0 0.0
    %95 = vmatpush1.msra.mxu0 %v60
    %96 = vmatprep.subr.mxu0 0.0
    %97 = vmatpush1.msra.mxu0 %v61
    %98 = vmatprep.subr.mxu0 0.0
    %99 = vmatpush1.msra.mxu0 %v62
    %100 = vmatprep.subr.mxu0 0.0
    %101 = vmatpush1.msra.mxu0 %v63
    %102 = vmatprep.subr.mxu0 0.0
    %103 = vmatpush1.msra.mxu0 %v64
    %104 = vmatprep.subr.mxu0 0.0
    %105 = vmatpush1.msra.mxu0 %v65
    %106 = vmatprep.subr.mxu0 0.0
    %107 = vmatpush1.msra.mxu0 %v66
    %108 = vmatprep.subr.mxu0 0.0
    %109 = vmatpush1.msra.mxu0 %v67
    %110 = vmatprep.subr.mxu0 0.0
    %111 = vmatpush1.msra.mxu0 %v68
    %112 = vmatprep.subr.mxu0 0.0
    %113 = vmatpush1.msra.mxu0 %v69
    %114 = vmatprep.subr.mxu0 0.0
    %115 = vmatpush1.msra.mxu0 0.0
    %116 = vmatprep.subr.mxu0 0.0
    %117 = vmatpush1.msra.mxu0 0.0
    %118 = vmatprep.subr.mxu0 0.0
    %119 = vmatpush1.msra.mxu0 0.0
    %120 = vmatprep.subr.mxu0 0.0
    %121 = vmatpush1.msra.mxu0 0.0
    %122 = vmatprep.subr.mxu0 0.0
    %123 = vmatpush1.msra.mxu0 0.0
    %124 = vmatprep.subr.mxu0 0.0
    %125 = vmatpush1.msra.mxu0 0.0
    %126 = vmatprep.subr.mxu0 0.0
    %127 = vmatpush1.msra.mxu0 0.0
    %128 = vmatprep.subr.mxu0 0.0
    %129 = vmatpush1.msra.mxu0 0.0
    %130 = vmatprep.subr.mxu0 0.0
    %131 = vmatpush1.msra.mxu0 0.0
    %132 = vmatprep.subr.mxu0 0.0
    %133 = vmatpush1.msra.mxu0 0.0
    %134 = vmatprep.subr.mxu0 0.0
    %135 = vmatpush1.msra.mxu0 0.0
    %136 = vmatprep.subr.mxu0 0.0
    %137 = vmatpush1.msra.mxu0 0.0
    %138 = vmatprep.subr.mxu0 0.0
    %139 = vmatpush1.msra.mxu0 0.0
    %140 = vmatprep.subr.mxu0 0.0
    %141 = vmatpush1.msra.mxu0 0.0
    %142 = vmatprep.subr.mxu0 0.0
    %143 = vmatpush1.msra.mxu0 0.0
    %144 = vmatprep.subr.mxu0 0.0
    %145 = vmatpush1.msra.mxu0 0.0
    %146 = vmatprep.subr.mxu0 0.0
    %147 = vmatpush1.msra.mxu0 0.0
    %148 = vmatprep.subr.mxu0 0.0
    %149 = vmatpush1.msra.mxu0 0.0
    %150 = vmatprep.subr.mxu0 0.0
    %151 = vmatpush1.msra.mxu0 0.0
    %152 = vmatprep.subr.mxu0 0.0
    %153 = vmatpush1.msra.mxu0 0.0
    %154 = vmatprep.mubr.f32.mxu0 0.0
    %155 = vmatmul.mubr.f32.gmra.mrb[0].mxu0 %v79
    %v156 = vpop.f32.mrb[0].mxu0
    %v157 = vadd.f32 %v75, %v156
    %v158 = vpop.f32.mrb[0].mxu0
    %159 = vmatprep.mubr.f32.mxu0 0.0
    %160 = vmatmul.mubr.f32.gmra.mrb[0].mxu0 %v82
    %v161 = vpop.f32.mrb[0].mxu0
    %v162 = vadd.f32 %v75, %v161
    %v163 = vpop.f32.mrb[0].mxu0
    %164 = vmatprep.mubr.f32.mxu0 0.0
    %165 = vmatmul.mubr.f32.gmra.mrb[0].mxu0 %v85
    %v166 = vpop.f32.mrb[0].mxu0
    %v167 = vadd.f32 %v75, %v166
    %v168 = vpop.f32.mrb[0].mxu0
    %169 = vmatprep.mubr.f32.mxu0 0.0
    %170 = vmatmul.mubr.f32.gmra.mrb[0].mxu0 %v88
    %v171 = vpop.f32.mrb[0].mxu0
    %v172 = vadd.f32 %v75, %v171
    %v173 = vpop.f32.mrb[0].mxu0
    %174 = vdwg.mxu0
    %v175 = vmax.f32 %v157, 0.0
    %v176 = vmax.f32 %v162, 0.0
    %v177 = vmax.f32 %v167, 0.0
    %v178 = vmax.f32 %v172, 0.0
    %vm179 = vcmask 523264
    %180 = vst.msk [vmem:[#allocation8] sm:$0xff] %vm179, %v175
    %181 = vst.msk [vmem:[#allocation8 + $0x8] sm:$0xff] %vm179, %v176
    %182 = vst.msk [vmem:[#allocation8 + $0x10] sm:$0xff] %vm179, %v177
    %183 = vst.msk [vmem:[#allocation8 + $0x18] sm:$0xff] %vm179, %v178
    // Predicated region
    $region26: #{fft_forward.24} parent=1 // pred_check
      _
    $region27: #{fft_forward.24} parent=1 // pred_check_branch
      %185 = sbr.rel (0) target = $region29
    $region28: #{fft_forward.24} parent=1 // pred_region
      %s187 = ssub.s32 512, 512
      %188 = vsyncadd [#allocation4], %s187
      %s189 = sshll.u32 [#allocation8], 4
      %s190 = int_to_ptr.vmem [resolvable:$true] %s189
      %195 = dma.vmem_to_hbm [thread:$0]  %s190, 512, %s3, [#allocation4], 128, 128, 8
    $region29: #{fft_forward.24} parent=1 // pred_fallthru
      _
    // Predicated region
    $region30: #{fft_forward.24} parent=1 // pred_check
      _
    $region31: #{fft_forward.24} parent=1 // pred_check_branch
      %197 = sbr.rel (0) target = $region33
    $region32: #{fft_forward.24} parent=1 // pred_region
      %198 = dma.done [#allocation4], 512
    $region33: #{fft_forward.24} parent=1 // pred_fallthru
      _
    %199 = vsyncpa [#allocation3], 1
    %200 = vsyncpa [#allocation6], 1
    %201 = vsyncpa [#allocation4], 1

// kernel: fft_forward.20
$region0: #{fft_forward.20}
  #allocation0 [shape = 'u32[]', space=smem, size = 0x4, offset = 0x4, fixed_abs, tag = 'smem constant byte address 0x4 - core index']
  #allocation1 [shape = 'u32[144,128]{1,0:T(1,128)}', space=vmem, size = 0x12000, scoped, tag = 'internal scratch']
  %s0 = inlined_call_operand.hbm [shape: f32[32,32], index: 0, kind: input, shape index: {}]
  %s1 = inlined_call_operand.hbm [shape: f32[32,32], index: 1, kind: input, shape index: {}]
  %s2 = inlined_call_operand.hbm [shape: f32[1,32], index: 2, kind: input, shape index: {}]
  %s3 = inlined_call_operand.hbm [shape: f32[32,32], index: 3, kind: output, shape index: {}]
  %s4 = sld [smem:[#allocation0]]
  $region34: #{fft_forward.20} parent=0
    _
  %s6 = ssub.s32 1, %s4
  %s7 = scalar_select 0, %s6, %s4
  $region1: #{fft_forward.20} parent=0
    #allocation2 [shape = 'u8[16384]{0}', space=vmem, size = 0x4000, scoped, tag = 'input window, operand 0, single buffered']
    #allocation3 [shape = 's32[1]{0}', space=sflag, size = 0x4, scoped, tag = 'scoped memory for fft_forward.20']
    #allocation4 [shape = 's32[1]{0}', space=sflag, size = 0x4, scoped, tag = 'scoped memory for fft_forward.20']
    #allocation5 [shape = 'u8[16384]{0}', space=vmem, size = 0x4000, scoped, tag = 'input window, operand 1, single buffered']
    #allocation6 [shape = 's32[1]{0}', space=sflag, size = 0x4, scoped, tag = 'scoped memory for fft_forward.20']
    #allocation7 [shape = 'u8[512]{0}', space=vmem, size = 0x400, scoped, tag = 'input window, operand 2, single buffered']
    #allocation8 [shape = 'u8[16384]{0}', space=vmem, size = 0x4000, scoped, tag = 'output window, operand 0, single buffered']
    %8 = vsyncpa [#allocation3], 0
    %9 = vsyncpa [#allocation6], 0
    %10 = vsyncpa [#allocation4], 0
    // Predicated region
    $region2: #{fft_forward.20} parent=1 // pred_check
      _
    $region3: #{fft_forward.20} parent=1 // pred_check_branch
      %12 = sbr.rel (0) target = $region5
    $region4: #{fft_forward.20} parent=1 // pred_region
      %s14 = ssub.s32 512, 512
      %15 = vsyncadd [#allocation3], %s14
      %s16 = sshll.u32 [#allocation2], 4
      %s17 = int_to_ptr.vmem [resolvable:$true] %s16
      %22 = dma.hbm_to_vmem [thread:$0]  %s0, 512, %s17, [#allocation3], 128, 128, 8
    $region5: #{fft_forward.20} parent=1 // pred_fallthru
      _
    // Predicated region
    $region6: #{fft_forward.20} parent=1 // pred_check
      _
    $region7: #{fft_forward.20} parent=1 // pred_check_branch
      %24 = sbr.rel (0) target = $region9
    $region8: #{fft_forward.20} parent=1 // pred_region
      %s26 = ssub.s32 512, 512
      %27 = vsyncadd [#allocation6], %s26
      %s28 = sshll.u32 [#allocation5], 4
      %s29 = int_to_ptr.vmem [resolvable:$true] %s28
      %34 = dma.hbm_to_vmem [thread:$0]  %s1, 512, %s29, [#allocation6], 128, 128, 8
    $region9: #{fft_forward.20} parent=1 // pred_fallthru
      _
    // Predicated region
    $region10: #{fft_forward.20} parent=1 // pred_check
      _
    $region11: #{fft_forward.20} parent=1 // pred_check_branch
      %36 = sbr.rel (0) target = $region13
    $region12: #{fft_forward.20} parent=1 // pred_region
      %s38 = ssub.s32 16, 16
      %39 = vsyncadd [#allocation6], %s38
      %s41 = sshll.u32 [#allocation7], 4
      %s42 = int_to_ptr.vmem [resolvable:$true] %s41
      %44 = dma.hbm_to_vmem [thread:$0]  %s2, 16, %s42, [#allocation6]
    $region13: #{fft_forward.20} parent=1 // pred_fallthru
      _
    // Predicated region
    $region14: #{fft_forward.20} parent=1 // pred_check
      _
    $region15: #{fft_forward.20} parent=1 // pred_check_branch
      %46 = sbr.rel (0) target = $region17
    $region16: #{fft_forward.20} parent=1 // pred_region
      %47 = dma.done [#allocation3], 512
    $region17: #{fft_forward.20} parent=1 // pred_fallthru
      _
    // Predicated region
    $region18: #{fft_forward.20} parent=1 // pred_check
      _
    $region19: #{fft_forward.20} parent=1 // pred_check_branch
      %49 = sbr.rel (0) target = $region21
    $region20: #{fft_forward.20} parent=1 // pred_region
      %50 = dma.done [#allocation6], 512
    $region21: #{fft_forward.20} parent=1 // pred_fallthru
      _
    // Predicated region
    $region22: #{fft_forward.20} parent=1 // pred_check
      _
    $region23: #{fft_forward.20} parent=1 // pred_check_branch
      %52 = sbr.rel (0) target = $region25
    $region24: #{fft_forward.20} parent=1 // pred_region
      %53 = dma.done [#allocation6], 16
    $region25: #{fft_forward.20} parent=1 // pred_fallthru
      _
    %v54 = vld [vmem:[#allocation2] sm:$0xff]
    %v55 = vld [vmem:[#allocation2 + $0x8] sm:$0xff]
    %v56 = vld [vmem:[#allocation2 + $0x10] sm:$0xff]
    %v57 = vld [vmem:[#allocation2 + $0x18] sm:$0xff]
    %v58 = vld [vmem:[#allocation5] sm:$0xff]
    %v59 = vld [vmem:[#allocation5 + $0x8] sm:$0xff]
    %v60 = vld [vmem:[#allocation5 + $0x10] sm:$0xff]
    %v61 = vld [vmem:[#allocation5 + $0x18] sm:$0xff]
    %v62 = vld [vmem:[#allocation7] sm:$0x1]
    %v64 = vlaneseq
    %v65 = vshrl.u32 %v64, 7
    %v66 = vsub.s32 0, %v65
    %v67 = vrot.slane %v62, %v66
    %vm69 = vcmask 261120
    %v71 = vsel %vm69, %v54, 0
    %v74 = vsel %vm69, %v55, 0
    %v77 = vsel %vm69, %v56, 0
    %v80 = vsel %vm69, %v57, 0
    %82 = vmatprep.subr.mxu0 0.0
    %83 = vmatpush1.msra.mxu0 %v58
    %84 = vmatprep.subr.mxu0 0.0
    %85 = vmatpush1.msra.mxu0 %v59
    %86 = vmatprep.subr.mxu0 0.0
    %87 = vmatpush1.msra.mxu0 %v60
    %88 = vmatprep.subr.mxu0 0.0
    %89 = vmatpush1.msra.mxu0 %v61
    %90 = vmatprep.subr.mxu0 0.0
    %91 = vmatpush1.msra.mxu0 0.0
    %92 = vmatprep.subr.mxu0 0.0
    %93 = vmatpush1.msra.mxu0 0.0
    %94 = vmatprep.subr.mxu0 0.0
    %95 = vmatpush1.msra.mxu0 0.0
    %96 = vmatprep.subr.mxu0 0.0
    %97 = vmatpush1.msra.mxu0 0.0
    %98 = vmatprep.subr.mxu0 0.0
    %99 = vmatpush1.msra.mxu0 0.0
    %100 = vmatprep.subr.mxu0 0.0
    %101 = vmatpush1.msra.mxu0 0.0
    %102 = vmatprep.subr.mxu0 0.0
    %103 = vmatpush1.msra.mxu0 0.0
    %104 = vmatprep.subr.mxu0 0.0
    %105 = vmatpush1.msra.mxu0 0.0
    %106 = vmatprep.subr.mxu0 0.0
    %107 = vmatpush1.msra.mxu0 0.0
    %108 = vmatprep.subr.mxu0 0.0
    %109 = vmatpush1.msra.mxu0 0.0
    %110 = vmatprep.subr.mxu0 0.0
    %111 = vmatpush1.msra.mxu0 0.0
    %112 = vmatprep.subr.mxu0 0.0
    %113 = vmatpush1.msra.mxu0 0.0
    %114 = vmatprep.subr.mxu0 0.0
    %115 = vmatpush1.msra.mxu0 0.0
    %116 = vmatprep.subr.mxu0 0.0
    %117 = vmatpush1.msra.mxu0 0.0
    %118 = vmatprep.subr.mxu0 0.0
    %119 = vmatpush1.msra.mxu0 0.0
    %120 = vmatprep.subr.mxu0 0.0
    %121 = vmatpush1.msra.mxu0 0.0
    %122 = vmatprep.subr.mxu0 0.0
    %123 = vmatpush1.msra.mxu0 0.0
    %124 = vmatprep.subr.mxu0 0.0
    %125 = vmatpush1.msra.mxu0 0.0
    %126 = vmatprep.subr.mxu0 0.0
    %127 = vmatpush1.msra.mxu0 0.0
    %128 = vmatprep.subr.mxu0 0.0
    %129 = vmatpush1.msra.mxu0 0.0
    %130 = vmatprep.subr.mxu0 0.0
    %131 = vmatpush1.msra.mxu0 0.0
    %132 = vmatprep.subr.mxu0 0.0
    %133 = vmatpush1.msra.mxu0 0.0
    %134 = vmatprep.subr.mxu0 0.0
    %135 = vmatpush1.msra.mxu0 0.0
    %136 = vmatprep.subr.mxu0 0.0
    %137 = vmatpush1.msra.mxu0 0.0
    %138 = vmatprep.subr.mxu0 0.0
    %139 = vmatpush1.msra.mxu0 0.0
    %140 = vmatprep.subr.mxu0 0.0
    %141 = vmatpush1.msra.mxu0 0.0
    %142 = vmatprep.subr.mxu0 0.0
    %143 = vmatpush1.msra.mxu0 0.0
    %144 = vmatprep.subr.mxu0 0.0
    %145 = vmatpush1.msra.mxu0 0.0
    %146 = vmatprep.mubr.f32.mxu0 0.0
    %147 = vmatmul.mubr.f32.gmra.mrb[0].mxu0 %v71
    %v148 = vpop.f32.mrb[0].mxu0
    %v149 = vadd.f32 %v67, %v148
    %v150 = vpop.f32.mrb[0].mxu0
    %151 = vmatprep.mubr.f32.mxu0 0.0
    %152 = vmatmul.mubr.f32.gmra.mrb[0].mxu0 %v74
    %v153 = vpop.f32.mrb[0].mxu0
    %v154 = vadd.f32 %v67, %v153
    %v155 = vpop.f32.mrb[0].mxu0
    %156 = vmatprep.mubr.f32.mxu0 0.0
    %157 = vmatmul.mubr.f32.gmra.mrb[0].mxu0 %v77
    %v158 = vpop.f32.mrb[0].mxu0
    %v159 = vadd.f32 %v67, %v158
    %v160 = vpop.f32.mrb[0].mxu0
    %161 = vmatprep.mubr.f32.mxu0 0.0
    %162 = vmatmul.mubr.f32.gmra.mrb[0].mxu0 %v80
    %v163 = vpop.f32.mrb[0].mxu0
    %v164 = vadd.f32 %v67, %v163
    %v165 = vpop.f32.mrb[0].mxu0
    %166 = vdwg.mxu0
    %167 = vst.msk [vmem:[#allocation8] sm:$0xff] %vm69, %v149
    %168 = vst.msk [vmem:[#allocation8 + $0x8] sm:$0xff] %vm69, %v154
    %169 = vst.msk [vmem:[#allocation8 + $0x10] sm:$0xff] %vm69, %v159
    %170 = vst.msk [vmem:[#allocation8 + $0x18] sm:$0xff] %vm69, %v164
    // Predicated region
    $region26: #{fft_forward.20} parent=1 // pred_check
      _
    $region27: #{fft_forward.20} parent=1 // pred_check_branch
      %172 = sbr.rel (0) target = $region29
    $region28: #{fft_forward.20} parent=1 // pred_region
      %s174 = ssub.s32 512, 512
      %175 = vsyncadd [#allocation4], %s174
      %s176 = sshll.u32 [#allocation8], 4
      %s177 = int_to_ptr.vmem [resolvable:$true] %s176
      %182 = dma.vmem_to_hbm [thread:$0]  %s177, 512, %s3, [#allocation4], 128, 128, 8
    $region29: #{fft_forward.20} parent=1 // pred_fallthru
      _
    // Predicated region
    $region30: #{fft_forward.20} parent=1 // pred_check
      _
    $region31: #{fft_forward.20} parent=1 // pred_check_branch
      %184 = sbr.rel (0) target = $region33
    $region32: #{fft_forward.20} parent=1 // pred_region
      %185 = dma.done [#allocation4], 512
    $region33: #{fft_forward.20} parent=1 // pred_fallthru
      _
    %186 = vsyncpa [#allocation3], 1
    %187 = vsyncpa [#allocation6], 1
    %188 = vsyncpa [#allocation4], 1

// kernel: fft_forward.23
$region0: #{fft_forward.23}
  #allocation0 [shape = 'u32[]', space=smem, size = 0x4, offset = 0x4, fixed_abs, tag = 'smem constant byte address 0x4 - core index']
  #allocation1 [shape = 'u32[144,128]{1,0:T(1,128)}', space=vmem, size = 0x12000, scoped, tag = 'internal scratch']
  %s0 = inlined_call_operand.hbm [shape: f32[32,32], index: 0, kind: input, shape index: {}]
  %s1 = inlined_call_operand.hbm [shape: f32[32,32], index: 1, kind: input, shape index: {}]
  %s2 = inlined_call_operand.hbm [shape: f32[1,32], index: 2, kind: input, shape index: {}]
  %s3 = inlined_call_operand.hbm [shape: f32[1,32], index: 3, kind: input, shape index: {}]
  %s4 = inlined_call_operand.hbm [shape: f32[32,32], index: 4, kind: output, shape index: {}]
  %s5 = sld [smem:[#allocation0]]
  $region42: #{fft_forward.23} parent=0
    _
  %s7 = ssub.s32 1, %s5
  %s8 = scalar_select 0, %s7, %s5
  $region1: #{fft_forward.23} parent=0
    #allocation2 [shape = 'u8[16384]{0}', space=vmem, size = 0x4000, scoped, tag = 'input window, operand 0, single buffered']
    #allocation3 [shape = 's32[1]{0}', space=sflag, size = 0x4, scoped, tag = 'scoped memory for fft_forward.23']
    #allocation4 [shape = 's32[1]{0}', space=sflag, size = 0x4, scoped, tag = 'scoped memory for fft_forward.23']
    #allocation5 [shape = 'u8[16384]{0}', space=vmem, size = 0x4000, scoped, tag = 'input window, operand 1, single buffered']
    #allocation6 [shape = 's32[1]{0}', space=sflag, size = 0x4, scoped, tag = 'scoped memory for fft_forward.23']
    #allocation7 [shape = 'u8[512]{0}', space=vmem, size = 0x400, scoped, tag = 'input window, operand 2, single buffered']
    #allocation8 [shape = 'u8[512]{0}', space=vmem, size = 0x400, scoped, tag = 'input window, operand 3, single buffered']
    #allocation9 [shape = 's32[1]{0}', space=sflag, size = 0x4, scoped, tag = 'scoped memory for fft_forward.23']
    #allocation10 [shape = 'u8[16384]{0}', space=vmem, size = 0x4000, scoped, tag = 'output window, operand 0, single buffered']
    %9 = vsyncpa [#allocation3], 0
    %10 = vsyncpa [#allocation6], 0
    %11 = vsyncpa [#allocation9], 0
    %12 = vsyncpa [#allocation4], 0
    // Predicated region
    $region2: #{fft_forward.23} parent=1 // pred_check
      _
    $region3: #{fft_forward.23} parent=1 // pred_check_branch
      %14 = sbr.rel (0) target = $region5
    $region4: #{fft_forward.23} parent=1 // pred_region
      %s16 = ssub.s32 512, 512
      %17 = vsyncadd [#allocation3], %s16
      %s18 = sshll.u32 [#allocation2], 4
      %s19 = int_to_ptr.vmem [resolvable:$true] %s18
      %24 = dma.hbm_to_vmem [thread:$0]  %s0, 512, %s19, [#allocation3], 128, 128, 8
    $region5: #{fft_forward.23} parent=1 // pred_fallthru
      _
    // Predicated region
    $region6: #{fft_forward.23} parent=1 // pred_check
      _
    $region7: #{fft_forward.23} parent=1 // pred_check_branch
      %26 = sbr.rel (0) target = $region9
    $region8: #{fft_forward.23} parent=1 // pred_region
      %s28 = ssub.s32 512, 512
      %29 = vsyncadd [#allocation6], %s28
      %s30 = sshll.u32 [#allocation5], 4
      %s31 = int_to_ptr.vmem [resolvable:$true] %s30
      %36 = dma.hbm_to_vmem [thread:$0]  %s1, 512, %s31, [#allocation6], 128, 128, 8
    $region9: #{fft_forward.23} parent=1 // pred_fallthru
      _
    // Predicated region
    $region10: #{fft_forward.23} parent=1 // pred_check
      _
    $region11: #{fft_forward.23} parent=1 // pred_check_branch
      %38 = sbr.rel (0) target = $region13
    $region12: #{fft_forward.23} parent=1 // pred_region
      %s40 = ssub.s32 16, 16
      %41 = vsyncadd [#allocation6], %s40
      %s43 = sshll.u32 [#allocation7], 4
      %s44 = int_to_ptr.vmem [resolvable:$true] %s43
      %46 = dma.hbm_to_vmem [thread:$0]  %s2, 16, %s44, [#allocation6]
    $region13: #{fft_forward.23} parent=1 // pred_fallthru
      _
    // Predicated region
    $region14: #{fft_forward.23} parent=1 // pred_check
      _
    $region15: #{fft_forward.23} parent=1 // pred_check_branch
      %48 = sbr.rel (0) target = $region17
    $region16: #{fft_forward.23} parent=1 // pred_region
      %s50 = ssub.s32 16, 16
      %51 = vsyncadd [#allocation9], %s50
      %s53 = sshll.u32 [#allocation8], 4
      %s54 = int_to_ptr.vmem [resolvable:$true] %s53
      %56 = dma.hbm_to_vmem [thread:$0]  %s3, 16, %s54, [#allocation9]
    $region17: #{fft_forward.23} parent=1 // pred_fallthru
      _
    // Predicated region
    $region18: #{fft_forward.23} parent=1 // pred_check
      _
    $region19: #{fft_forward.23} parent=1 // pred_check_branch
      %58 = sbr.rel (0) target = $region21
    $region20: #{fft_forward.23} parent=1 // pred_region
      %59 = dma.done [#allocation3], 512
    $region21: #{fft_forward.23} parent=1 // pred_fallthru
      _
    // Predicated region
    $region22: #{fft_forward.23} parent=1 // pred_check
      _
    $region23: #{fft_forward.23} parent=1 // pred_check_branch
      %61 = sbr.rel (0) target = $region25
    $region24: #{fft_forward.23} parent=1 // pred_region
      %62 = dma.done [#allocation6], 512
    $region25: #{fft_forward.23} parent=1 // pred_fallthru
      _
    // Predicated region
    $region26: #{fft_forward.23} parent=1 // pred_check
      _
    $region27: #{fft_forward.23} parent=1 // pred_check_branch
      %64 = sbr.rel (0) target = $region29
    $region28: #{fft_forward.23} parent=1 // pred_region
      %65 = dma.done [#allocation6], 16
    $region29: #{fft_forward.23} parent=1 // pred_fallthru
      _
    // Predicated region
    $region30: #{fft_forward.23} parent=1 // pred_check
      _
    $region31: #{fft_forward.23} parent=1 // pred_check_branch
      %67 = sbr.rel (0) target = $region33
    $region32: #{fft_forward.23} parent=1 // pred_region
      %68 = dma.done [#allocation9], 16
    $region33: #{fft_forward.23} parent=1 // pred_fallthru
      _
    %v69 = vld [vmem:[#allocation2] sm:$0xff]
    %v70 = vld [vmem:[#allocation2 + $0x8] sm:$0xff]
    %v71 = vld [vmem:[#allocation2 + $0x10] sm:$0xff]
    %v72 = vld [vmem:[#allocation2 + $0x18] sm:$0xff]
    %v73 = vld [vmem:[#allocation5] sm:$0xff]
    %v74 = vld [vmem:[#allocation5 + $0x8] sm:$0xff]
    %v75 = vld [vmem:[#allocation5 + $0x10] sm:$0xff]
    %v76 = vld [vmem:[#allocation5 + $0x18] sm:$0xff]
    %v77 = vadd.f32 %v69, %v73
    %v78 = vadd.f32 %v70, %v74
    %v79 = vadd.f32 %v71, %v75
    %v80 = vadd.f32 %v72, %v76
    %vm81 = vcmask 261120
    %v82 = vsel %vm81, %v77, 0.0
    %83 = vadd.xlane.f32.xlu0 %v82
    %v84 = vpop.xlane.xlu0 %83
    %v85 = vsel %vm81, %v78, 0.0
    %86 = vadd.xlane.f32.xlu0 %v85
    %v87 = vpop.xlane.xlu0 %86
    %v88 = vsel %vm81, %v79, 0.0
    %89 = vadd.xlane.f32.xlu0 %v88
    %v90 = vpop.xlane.xlu0 %89
    %v91 = vsel %vm81, %v80, 0.0
    %92 = vadd.xlane.f32.xlu0 %v91
    %v93 = vpop.xlane.xlu0 %92
    %v94 = vmul.f32 %v77, %v77
    %v95 = vmul.f32 %v78, %v78
    %v96 = vmul.f32 %v79, %v79
    %v97 = vmul.f32 %v80, %v80
    %v98 = vsel %vm81, %v94, 0.0
    %99 = vadd.xlane.f32.xlu0 %v98
    %v100 = vpop.xlane.xlu0 %99
    %v101 = vsel %vm81, %v95, 0.0
    %102 = vadd.xlane.f32.xlu0 %v101
    %v103 = vpop.xlane.xlu0 %102
    %v104 = vsel %vm81, %v96, 0.0
    %105 = vadd.xlane.f32.xlu0 %v104
    %v106 = vpop.xlane.xlu0 %105
    %v107 = vsel %vm81, %v97, 0.0
    %108 = vadd.xlane.f32.xlu0 %v107
    %v109 = vpop.xlane.xlu0 %108
    %v110 = vmul.f32 %v84, 0.03125
    %v111 = vmul.f32 %v87, 0.03125
    %v112 = vmul.f32 %v90, 0.03125
    %v113 = vmul.f32 %v93, 0.03125
    %v114 = vmul.f32 %v100, 0.03125
    %v115 = vmul.f32 %v103, 0.03125
    %v116 = vmul.f32 %v106, 0.03125
    %v117 = vmul.f32 %v109, 0.03125
    %v118 = vmul.f32 %v110, %v110
    %v119 = vmul.f32 %v111, %v111
    %v120 = vmul.f32 %v112, %v112
    %v121 = vmul.f32 %v113, %v113
    %v122 = vsub.f32 %v114, %v118
    %v123 = vsub.f32 %v115, %v119
    %v124 = vsub.f32 %v116, %v120
    %v125 = vsub.f32 %v117, %v121
    %v126 = vmax.f32 %v122, 0.0
    %v127 = vmax.f32 %v123, 0.0
    %v128 = vmax.f32 %v124, 0.0
    %v129 = vmax.f32 %v125, 0.0
    %v130 = vadd.f32 %v126, 1e-05
    %v131 = vadd.f32 %v127, 1e-05
    %v132 = vadd.f32 %v128, 1e-05
    %v133 = vadd.f32 %v129, 1e-05
    %v134 = vrsqrt.pop %v130
    %v135 = vrsqrt.pop %v131
    %v136 = vrsqrt.pop %v132
    %v137 = vrsqrt.pop %v133
    %v138 = vsub.f32 %v77, %v110
    %v139 = vsub.f32 %v78, %v111
    %v140 = vsub.f32 %v79, %v112
    %v141 = vsub.f32 %v80, %v113
    %v142 = vmul.f32 %v138, %v134
    %v143 = vmul.f32 %v139, %v135
    %v144 = vmul.f32 %v140, %v136
    %v145 = vmul.f32 %v141, %v137
    %v146 = vld [vmem:[#allocation7] sm:$0x1]
    %v148 = vlaneseq
    %v149 = vshrl.u32 %v148, 7
    %v150 = vsub.s32 0, %v149
    %v151 = vrot.slane %v146, %v150
    %v153 = vmul.f32 %v142, %v151
    %v154 = vmul.f32 %v143, %v151
    %v155 = vmul.f32 %v144, %v151
    %v156 = vmul.f32 %v145, %v151
    %v157 = vld [vmem:[#allocation8] sm:$0x1]
    %v159 = vlaneseq
    %v160 = vshrl.u32 %v159, 7
    %v161 = vsub.s32 0, %v160
    %v162 = vrot.slane %v157, %v161
    %v164 = vadd.f32 %v153, %v162
    %v165 = vadd.f32 %v154, %v162
    %v166 = vadd.f32 %v155, %v162
    %v167 = vadd.f32 %v156, %v162
    %168 = vst.msk [vmem:[#allocation10] sm:$0xff] %vm81, %v164
    %169 = vst.msk [vmem:[#allocation10 + $0x8] sm:$0xff] %vm81, %v165
    %170 = vst.msk [vmem:[#allocation10 + $0x10] sm:$0xff] %vm81, %v166
    %171 = vst.msk [vmem:[#allocation10 + $0x18] sm:$0xff] %vm81, %v167
    // Predicated region
    $region34: #{fft_forward.23} parent=1 // pred_check
      _
    $region35: #{fft_forward.23} parent=1 // pred_check_branch
      %173 = sbr.rel (0) target = $region37
    $region36: #{fft_forward.23} parent=1 // pred_region
      %s175 = ssub.s32 512, 512
      %176 = vsyncadd [#allocation4], %s175
      %s177 = sshll.u32 [#allocation10], 4
      %s178 = int_to_ptr.vmem [resolvable:$true] %s177
      %183 = dma.vmem_to_hbm [thread:$0]  %s178, 512, %s4, [#allocation4], 128, 128, 8
    $region37: #{fft_forward.23} parent=1 // pred_fallthru
      _
    // Predicated region
    $region38: #{fft_forward.23} parent=1 // pred_check
      _
    $region39: #{fft_forward.23} parent=1 // pred_check_branch
      %185 = sbr.rel (0) target = $region41
    $region40: #{fft_forward.23} parent=1 // pred_region
      %186 = dma.done [#allocation4], 512
    $region41: #{fft_forward.23} parent=1 // pred_fallthru
      _
    %187 = vsyncpa [#allocation3], 1
    %188 = vsyncpa [#allocation6], 1
    %189 = vsyncpa [#allocation9], 1
    %190 = vsyncpa [#allocation4], 1

// kernel: fft_forward.21
$region0: #{fft_forward.21}
  #allocation0 [shape = 'u32[]', space=smem, size = 0x4, offset = 0x4, fixed_abs, tag = 'smem constant byte address 0x4 - core index']
  #allocation1 [shape = 'u32[144,128]{1,0:T(1,128)}', space=vmem, size = 0x12000, scoped, tag = 'internal scratch']
  %s0 = inlined_call_operand.hbm [shape: f32[2,16,32], index: 0, kind: input, shape index: {}]
  %s1 = inlined_call_operand.hbm [shape: f32[2,16,32], index: 1, kind: input, shape index: {}]
  %s2 = inlined_call_operand.hbm [shape: f32[2,16,32], index: 2, kind: input, shape index: {}]
  %s3 = inlined_call_operand.hbm [shape: f32[2,16,32], index: 3, kind: output, shape index: {}]
  %s4 = sld [smem:[#allocation0]]
  $region57: #{fft_forward.21} parent=0
    _
  %s6 = ssub.s32 1, %s4
  %s7 = scalar_select 0, %s6, %s4
  $region1: #{fft_forward.21} parent=0
    #allocation2 [shape = 'u8[16384]{0}', space=vmem, size = 0x4000, scoped, tag = 'input window, operand 0']
    #allocation3 [shape = 's32[2]{0}', space=sflag, size = 0x8, scoped, tag = 'scoped memory for fft_forward.21']
    #allocation4 [shape = 's32[2]{0}', space=sflag, size = 0x8, scoped, tag = 'scoped memory for fft_forward.21']
    #allocation5 [shape = 'u8[16384]{0}', space=vmem, size = 0x4000, scoped, tag = 'input window, operand 1']
    #allocation6 [shape = 's32[2]{0}', space=sflag, size = 0x8, scoped, tag = 'scoped memory for fft_forward.21']
    #allocation7 [shape = 'u8[16384]{0}', space=vmem, size = 0x4000, scoped, tag = 'input window, operand 2']
    #allocation8 [shape = 'u8[16384]{0}', space=vmem, size = 0x4000, scoped, tag = 'output window, operand 0']
    %8 = vsyncpa [#allocation3], 0
    %s9 = scalar_lea.sflag [#allocation3], 1
    %10 = vsyncpa %s9, 0
    %11 = vsyncpa [#allocation6], 0
    %s12 = scalar_lea.sflag [#allocation6], 1
    %13 = vsyncpa %s12, 0
    %14 = vsyncpa [#allocation4], 0
    %s15 = scalar_lea.sflag [#allocation4], 1
    %16 = vsyncpa %s15, 0
    loop: start=0, step=1, limit=4
    $region2: #{fft_forward.21} parent=1 // loop_pre_header
      _
    $region3: #{fft_forward.21} parent=1 // loop_header
      %s18 = sphi 0, %s22
      %p19 = scmp.ge.s32.totalorder %s18, 4
      %s28 = sphi 0, %s30
      %s31 = sphi 0, %s28
      %s32 = sphi 0, %s31
      %s48 = sphi 0, %s32
      %s54 = sphi 0, %s56
      %s57 = sphi 0, %s54
      %s58 = sphi 0, %s57
      %s74 = sphi 0, %s58
      %s80 = sphi 0, %s82
      %s83 = sphi 0, %s80
      %s84 = sphi 0, %s83
      %s100 = sphi 0, %s84
      %s106 = sphi 0, %s108
      %s109 = sphi 0, %s106
      %s110 = sphi 0, %s109
      %s126 = sphi 0, %s110
    $region4: #{fft_forward.21} parent=1 // loop_header_branch
      %21 = sbr.rel (%p19) target = $region8
    $region5: #{fft_forward.21} parent=1 // loop_body
      %s23 = ssub.s32 %s18, 1
      %s24 = ssub.s32 %s18, 2
      %s25 = sadd.s32 %s18, 1
      %s26 = ssub.s32 %s18, %s25
      %p27 = scmp.eq.s32.totalorder %s26, 0
      %s29 = sadd.s32 %s28, 1
      %s30 = scalar_select %p27, %s28, %s29
      %p33 = pneg %p27
      %p34 = scmp.eq.s32.totalorder %s18, 1
      %p35 = por %p33, %p34
      %p36 = scmp.ne.s32.totalorder %s28, %s31
      %p37 = scmp.eq.s32.totalorder %s18, 0
      %p38 = por %p36, %p37
      %p39 = scmp.ne.s32.totalorder %s28, %s31
      %p40 = scmp.eq.s32.totalorder %s23, 1
      %p41 = por %p39, %p40
      %p42 = scmp.ne.s32.totalorder %s31, %s32
      %p43 = scmp.eq.s32.totalorder %s23, 0
      %p44 = por %p42, %p43
      %p45 = scmp.ne.s32.totalorder %s31, %s32
      %p46 = scmp.eq.s32.totalorder %s24, 1
      %p47 = por %p45, %p46
      %p49 = scmp.ne.s32.totalorder %s32, %s48
      %p50 = scmp.eq.s32.totalorder %s24, 0
      %p51 = por %p49, %p50
      %s52 = ssub.s32 %s18, %s25
      %p53 = scmp.eq.s32.totalorder %s52, 0
      %s55 = sadd.s32 %s54, 1
      %s56 = scalar_select %p53, %s54, %s55
      %p59 = pneg %p53
      %p60 = scmp.eq.s32.totalorder %s18, 1
      %p61 = por %p59, %p60
      %p62 = scmp.ne.s32.totalorder %s54, %s57
      %p63 = scmp.eq.s32.totalorder %s18, 0
      %p64 = por %p62, %p63
      %p65 = scmp.ne.s32.totalorder %s54, %s57
      %p66 = scmp.eq.s32.totalorder %s23, 1
      %p67 = por %p65, %p66
      %p68 = scmp.ne.s32.totalorder %s57, %s58
      %p69 = scmp.eq.s32.totalorder %s23, 0
      %p70 = por %p68, %p69
      %p71 = scmp.ne.s32.totalorder %s57, %s58
      %p72 = scmp.eq.s32.totalorder %s24, 1
      %p73 = por %p71, %p72
      %p75 = scmp.ne.s32.totalorder %s58, %s74
      %p76 = scmp.eq.s32.totalorder %s24, 0
      %p77 = por %p75, %p76
      %s78 = ssub.s32 %s18, %s25
      %p79 = scmp.eq.s32.totalorder %s78, 0
      %s81 = sadd.s32 %s80, 1
      %s82 = scalar_select %p79, %s80, %s81
      %p85 = pneg %p79
      %p86 = scmp.eq.s32.totalorder %s18, 1
      %p87 = por %p85, %p86
      %p88 = scmp.ne.s32.totalorder %s80, %s83
      %p89 = scmp.eq.s32.totalorder %s18, 0
      %p90 = por %p88, %p89
      %p91 = scmp.ne.s32.totalorder %s80, %s83
      %p92 = scmp.eq.s32.totalorder %s23, 1
      %p93 = por %p91, %p92
      %p94 = scmp.ne.s32.totalorder %s83, %s84
      %p95 = scmp.eq.s32.totalorder %s23, 0
      %p96 = por %p94, %p95
      %p97 = scmp.ne.s32.totalorder %s83, %s84
      %p98 = scmp.eq.s32.totalorder %s24, 1
      %p99 = por %p97, %p98
      %p101 = scmp.ne.s32.totalorder %s84, %s100
      %p102 = scmp.eq.s32.totalorder %s24, 0
      %p103 = por %p101, %p102
      %s104 = ssub.s32 %s18, %s25
      %p105 = scmp.eq.s32.totalorder %s104, 0
      %s107 = sadd.s32 %s106, 1
      %s108 = scalar_select %p105, %s106, %s107
      %p111 = pneg %p105
      %p112 = scmp.eq.s32.totalorder %s18, 1
      %p113 = por %p111, %p112
      %p114 = scmp.ne.s32.totalorder %s106, %s109
      %p115 = scmp.eq.s32.totalorder %s18, 0
      %p116 = por %p114, %p115
      %p117 = scmp.ne.s32.totalorder %s106, %s109
      %p118 = scmp.eq.s32.totalorder %s23, 1
      %p119 = por %p117, %p118
      %p120 = scmp.ne.s32.totalorder %s109, %s110
      %p121 = scmp.eq.s32.totalorder %s23, 0
      %p122 = por %p120, %p121
      %p123 = scmp.ne.s32.totalorder %s109, %s110
      %p124 = scmp.eq.s32.totalorder %s24, 1
      %p125 = por %p123, %p124
      %p127 = scmp.ne.s32.totalorder %s110, %s126
      %p128 = scmp.eq.s32.totalorder %s24, 0
      %p129 = por %p127, %p128
      %p130 = scmp.le.s32.totalorder 1, %s18
      %p131 = scmp.lt.s32.totalorder %s18, 3
      %p132 = pnand %p130, %p131
      %p133 = pneg %p132
      // Predicated region
      $region9: #{fft_forward.21} parent=5 // pred_check
        _
      $region10: #{fft_forward.21} parent=5 // pred_check_branch
        %135 = sbr.rel (%p132) target = $region12
      $region11: #{fft_forward.21} parent=5 // pred_region
        %s136 = ssub.s32 %s18, 1
      $region12: #{fft_forward.21} parent=5 // pred_fallthru
        _
      %p137 = scmp.lt.s32.totalorder %s18, 2
      // Predicated region
      $region13: #{fft_forward.21} parent=5 // pred_check
        %p138 = pneg %p137
      $region14: #{fft_forward.21} parent=5 // pred_check_branch
        %140 = sbr.rel (%p138) target = $region16
      $region15: #{fft_forward.21} parent=5 // pred_region
        // Predicated region
        $region17: #{fft_forward.21} parent=15 // pred_check
          %p141 = pneg %p38
        $region18: #{fft_forward.21} parent=15 // pred_check_branch
          %143 = sbr.rel (%p141) target = $region20
        $region19: #{fft_forward.21} parent=15 // pred_region
          %s144 = sand.u32 %s28, 1
          %s145 = scalar_lea.sflag [#allocation3], %s144
          %s146 = sand.u32 %s28, 1
          %s147 = smul.addr %s146, 16
          %s148 = scalar_lea.vmem [#allocation2], %s147
          %s150 = ssub.s32 256, 256
          %151 = vsyncadd %s145, %s150
          %s152 = smul.addr %s18, 2
          %s153 = smul.addr %s152, 128
          %s154 = scalar_lea.hbm %s0, %s153
          %s155 = sshll.u32 %s148, 4
          %s156 = int_to_ptr.vmem [resolvable:$true] %s155
          %161 = dma.hbm_to_vmem [thread:$0]  %s154, 256, %s156, %s145, 128, 128, 8
        $region20: #{fft_forward.21} parent=15 // pred_fallthru
          _
        // Predicated region
        $region21: #{fft_forward.21} parent=15 // pred_check
          %p162 = pneg %p64
        $region22: #{fft_forward.21} parent=15 // pred_check_branch
          %164 = sbr.rel (%p162) target = $region24
        $region23: #{fft_forward.21} parent=15 // pred_region
          %s165 = sand.u32 %s18, 1
          %s166 = scalar_lea.sflag [#allocation6], %s165
          %s167 = sand.u32 %s54, 1
          %s168 = smul.addr %s167, 16
          %s169 = scalar_lea.vmem [#allocation5], %s168
          %s171 = ssub.s32 256, 256
          %172 = vsyncadd %s166, %s171
          %s173 = smul.addr %s18, 2
          %s174 = smul.addr %s173, 128
          %s175 = scalar_lea.hbm %s1, %s174
          %s176 = sshll.u32 %s169, 4
          %s177 = int_to_ptr.vmem [resolvable:$true] %s176
          %182 = dma.hbm_to_vmem [thread:$0]  %s175, 256, %s177, %s166, 128, 128, 8
        $region24: #{fft_forward.21} parent=15 // pred_fallthru
          _
        // Predicated region
        $region25: #{fft_forward.21} parent=15 // pred_check
          %p183 = pneg %p90
        $region26: #{fft_forward.21} parent=15 // pred_check_branch
          %185 = sbr.rel (%p183) target = $region28
        $region27: #{fft_forward.21} parent=15 // pred_region
          %s186 = sand.u32 %s18, 1
          %s187 = scalar_lea.sflag [#allocation6], %s186
          %s188 = sand.u32 %s80, 1
          %s189 = smul.addr %s188, 16
          %s190 = scalar_lea.vmem [#allocation7], %s189
          %s192 = ssub.s32 256, 256
          %193 = vsyncadd %s187, %s192
          %s194 = smul.addr %s18, 2
          %s195 = smul.addr %s194, 128
          %s196 = scalar_lea.hbm %s2, %s195
          %s197 = sshll.u32 %s190, 4
          %s198 = int_to_ptr.vmem [resolvable:$true] %s197
          %203 = dma.hbm_to_vmem [thread:$0]  %s196, 256, %s198, %s187, 128, 128, 8
        $region28: #{fft_forward.21} parent=15 // pred_fallthru
          _
      $region16: #{fft_forward.21} parent=5 // pred_fallthru
        _
      %p204 = scmp.le.s32.totalorder 1, %s18
      %p205 = scmp.lt.s32.totalorder %s18, 3
      %p206 = pnand %p204, %p205
      %p207 = pneg %p206
      // Predicated region
      $region29: #{fft_forward.21} parent=5 // pred_check
        _
      $region30: #{fft_forward.21} parent=5 // pred_check_branch
        %209 = sbr.rel (%p206) target = $region32
      $region31: #{fft_forward.21} parent=5 // pred_region
        %s210 = ssub.s32 %s18, 1
        %s211 = sand.u32 %s31, 1
        %s212 = scalar_lea.sflag [#allocation3], %s211
        %s213 = sand.u32 %s31, 1
        %s214 = smul.addr %s213, 16
        %s215 = scalar_lea.vmem [#allocation2], %s214
        // Predicated region
        $region33: #{fft_forward.21} parent=31 // pred_check
          %p216 = pneg %p44
        $region34: #{fft_forward.21} parent=31 // pred_check_branch
          %218 = sbr.rel (%p216) target = $region36
        $region35: #{fft_forward.21} parent=31 // pred_region
          %219 = dma.done %s212, 256
        $region36: #{fft_forward.21} parent=31 // pred_fallthru
          _
        %s220 = sand.u32 %s23, 1
        %s221 = scalar_lea.sflag [#allocation6], %s220
        %s222 = sand.u32 %s57, 1
        %s223 = smul.addr %s222, 16
        %s224 = scalar_lea.vmem [#allocation5], %s223
        // Predicated region
        $region37: #{fft_forward.21} parent=31 // pred_check
          %p225 = pneg %p70
        $region38: #{fft_forward.21} parent=31 // pred_check_branch
          %227 = sbr.rel (%p225) target = $region40
        $region39: #{fft_forward.21} parent=31 // pred_region
          %228 = dma.done %s221, 256
        $region40: #{fft_forward.21} parent=31 // pred_fallthru
          _
        %s229 = sand.u32 %s23, 1
        %s230 = scalar_lea.sflag [#allocation6], %s229
        %s231 = sand.u32 %s83, 1
        %s232 = smul.addr %s231, 16
        %s233 = scalar_lea.vmem [#allocation7], %s232
        // Predicated region
        $region41: #{fft_forward.21} parent=31 // pred_check
          %p234 = pneg %p96
        $region42: #{fft_forward.21} parent=31 // pred_check_branch
          %236 = sbr.rel (%p234) target = $region44
        $region43: #{fft_forward.21} parent=31 // pred_region
          %237 = dma.done %s230, 256
        $region44: #{fft_forward.21} parent=31 // pred_fallthru
          _
        %s238 = sand.u32 %s31, 1
        %s239 = scalar_lea.sflag [#allocation3], %s238
        %s240 = sand.u32 %s31, 1
        %s241 = smul.addr %s240, 16
        %s242 = scalar_lea.vmem [#allocation2], %s241
        %p243 = pneg %p44
        %p244 = pneg %p41
        %s245 = sand.u32 %s23, 1
        %s246 = scalar_lea.sflag [#allocation6], %s245
        %s247 = sand.u32 %s57, 1
        %s248 = smul.addr %s247, 16
        %s249 = scalar_lea.vmem [#allocation5], %s248
        %p250 = pneg %p70
        %p251 = pneg %p67
        %s252 = sand.u32 %s23, 1
        %s253 = scalar_lea.sflag [#allocation6], %s252
        %s254 = sand.u32 %s83, 1
        %s255 = smul.addr %s254, 16
        %s256 = scalar_lea.vmem [#allocation7], %s255
        %p257 = pneg %p96
        %p258 = pneg %p93
        %p259 = pneg %p122
        %p260 = pneg %p119
        %s261 = sand.u32 %s109, 1
        %s262 = scalar_lea.sflag [#allocation4], %s261
        %s263 = sand.u32 %s109, 1
        %s264 = smul.addr %s263, 16
        %s265 = scalar_lea.vmem [#allocation8], %s264
        %v266 = vld [vmem:[%s215] sm:$0xff]
        %v267 = vld [vmem:[%s215 + $0x8] sm:$0xff]
        %v268 = vld [vmem:[%s224] sm:$0xff]
        %v269 = vld [vmem:[%s224 + $0x8] sm:$0xff]
        %v270 = vld [vmem:[%s233] sm:$0xff]
        %v271 = vld [vmem:[%s233 + $0x8] sm:$0xff]
        %v272 = vlaneseq
        %v273 = vshrl.u32 %v272, 7
        %v274 = vadd.s32 %v273, 8
        %v275 = vlaneseq
        %v276 = vand.u32 %v275, 127
        %vm277 = vcmp.le.s32.totalorder %v276, %v273
        %vm278 = vcmp.le.s32.totalorder %v276, %v274
        %v279 = vmul.f32 %v266, 0.25
        %v280 = vmul.f32 %v267, 0.25
        %vm281 = vcmask 130048
        %v283 = vsel %vm281, %v279, 0
        %v286 = vsel %vm281, %v280, 0
        %v289 = vsel %vm281, %v268, 0
        %v292 = vsel %vm281, %v269, 0
        %294 = vmatprep.subr.mxu0 0.0
        %295 = vmatpush1.xpose.msra.mxu0 %v289
        %296 = vmatprep.subr.mxu0 0.0
        %297 = vmatpush1.xpose.msra.mxu0 %v292
        %298 = vmatprep.subr.mxu0 0.0
        %299 = vmatpush1.xpose.msra.mxu0 0.0
        %300 = vmatprep.subr.mxu0 0.0
        %301 = vmatpush1.xpose.msra.mxu0 0.0
        %302 = vmatprep.subr.mxu0 0.0
        %303 = vmatpush1.xpose.msra.mxu0 0.0
        %304 = vmatprep.subr.mxu0 0.0
        %305 = vmatpush1.xpose.msra.mxu0 0.0
        %306 = vmatprep.subr.mxu0 0.0
        %307 = vmatpush1.xpose.msra.mxu0 0.0
        %308 = vmatprep.subr.mxu0 0.0
        %309 = vmatpush1.xpose.msra.mxu0 0.0
        %310 = vmatprep.subr.mxu0 0.0
        %311 = vmatpush1.xpose.msra.mxu0 0.0
        %312 = vmatprep.subr.mxu0 0.0
        %313 = vmatpush1.xpose.msra.mxu0 0.0
        %314 = vmatprep.subr.mxu0 0.0
        %315 = vmatpush1.xpose.msra.mxu0 0.0
        %316 = vmatprep.subr.mxu0 0.0
        %317 = vmatpush1.xpose.msra.mxu0 0.0
        %318 = vmatprep.subr.mxu0 0.0
        %319 = vmatpush1.xpose.msra.mxu0 0.0
        %320 = vmatprep.subr.mxu0 0.0
        %321 = vmatpush1.xpose.msra.mxu0 0.0
        %322 = vmatprep.subr.mxu0 0.0
        %323 = vmatpush1.xpose.msra.mxu0 0.0
        %324 = vmatprep.subr.mxu0 0.0
        %325 = vmatpush1.xpose.msra.mxu0 0.0
        %326 = vmatprep.subr.mxu0 0.0
        %327 = vmatpush1.xpose.msra.mxu0 0.0
        %328 = vmatprep.subr.mxu0 0.0
        %329 = vmatpush1.xpose.msra.mxu0 0.0
        %330 = vmatprep.subr.mxu0 0.0
        %331 = vmatpush1.xpose.msra.mxu0 0.0
        %332 = vmatprep.subr.mxu0 0.0
        %333 = vmatpush1.xpose.msra.mxu0 0.0
        %334 = vmatprep.subr.mxu0 0.0
        %335 = vmatpush1.xpose.msra.mxu0 0.0
        %336 = vmatprep.subr.mxu0 0.0
        %337 = vmatpush1.xpose.msra.mxu0 0.0
        %338 = vmatprep.subr.mxu0 0.0
        %339 = vmatpush1.xpose.msra.mxu0 0.0
        %340 = vmatprep.subr.mxu0 0.0
        %341 = vmatpush1.xpose.msra.mxu0 0.0
        %342 = vmatprep.subr.mxu0 0.0
        %343 = vmatpush1.xpose.msra.mxu0 0.0
        %344 = vmatprep.subr.mxu0 0.0
        %345 = vmatpush1.xpose.msra.mxu0 0.0
        %346 = vmatprep.subr.mxu0 0.0
        %347 = vmatpush1.xpose.msra.mxu0 0.0
        %348 = vmatprep.subr.mxu0 0.0
        %349 = vmatpush1.xpose.msra.mxu0 0.0
        %350 = vmatprep.subr.mxu0 0.0
        %351 = vmatpush1.xpose.msra.mxu0 0.0
        %352 = vmatprep.subr.mxu0 0.0
        %353 = vmatpush1.xpose.msra.mxu0 0.0
        %354 = vmatprep.subr.mxu0 0.0
        %355 = vmatpush1.xpose.msra.mxu0 0.0
        %356 = vmatprep.subr.mxu0 0.0
        %357 = vmatpush1.xpose.msra.mxu0 0.0
        %358 = vmatprep.mubr.f32.mxu0 0.0
        %359 = vmatmul.mubr.f32.gmra.mrb[0].mxu0 %v283
        %v360 = vpop.f32.mrb[0].mxu0
        %v361 = vadd.f32 0.0, %v360
        %v362 = vpop.f32.mrb[0].mxu0
        %363 = vmatprep.mubr.f32.mxu0 0.0
        %364 = vmatmul.mubr.f32.gmra.mrb[0].mxu0 %v286
        %v365 = vpop.f32.mrb[0].mxu0
        %v366 = vadd.f32 0.0, %v365
        %v367 = vpop.f32.mrb[0].mxu0
        %368 = vdwg.mxu0
        %v369 = vsel %vm277, %v361, -10000.0
        %v370 = vsel %vm278, %v366, -10000.0
        %v371 = vsel %vm281, %v369, -inf
        %372 = vmax.xlane.f32.xlu0 %v371
        %v373 = vpop.xlane.xlu0 %372
        %v374 = vsel %vm281, %v370, -inf
        %375 = vmax.xlane.f32.xlu0 %v374
        %v376 = vpop.xlane.xlu0 %375
        %v377 = vsub.f32 %v369, %v373
        %v378 = vsub.f32 %v370, %v376
        %v379 = vmul.f32 %v377, 1.442695
        %v380 = vpow.pop %v379
        %v381 = vmul.f32 %v378, 1.442695
        %v382 = vpow.pop %v381
        %v383 = vsel %vm281, %v380, 0.0
        %384 = vadd.xlane.f32.xlu0 %v383
        %v385 = vpop.xlane.xlu0 %384
        %v386 = vsel %vm281, %v382, 0.0
        %387 = vadd.xlane.f32.xlu0 %v386
        %v388 = vpop.xlane.xlu0 %387
        %v389 = vrcp.pop %v385
        %v390 = vmul.f32 %v380, %v389
        %v391 = vrcp.pop %v388
        %v392 = vmul.f32 %v382, %v391
        %v394 = vsel %vm281, %v390, 0
        %v397 = vsel %vm281, %v392, 0
        %399 = vmatprep.subr.mxu0 0.0
        %400 = vmatpush1.msra.mxu0 %v270
        %401 = vmatprep.subr.mxu0 0.0
        %402 = vmatpush1.msra.mxu0 %v271
        %403 = vmatprep.subr.mxu0 0.0
        %404 = vmatpush1.msra.mxu0 0.0
        %405 = vmatprep.subr.mxu0 0.0
        %406 = vmatpush1.msra.mxu0 0.0
        %407 = vmatprep.subr.mxu0 0.0
        %408 = vmatpush1.msra.mxu0 0.0
        %409 = vmatprep.subr.mxu0 0.0
        %410 = vmatpush1.msra.mxu0 0.0
        %411 = vmatprep.subr.mxu0 0.0
        %412 = vmatpush1.msra.mxu0 0.0
        %413 = vmatprep.subr.mxu0 0.0
        %414 = vmatpush1.msra.mxu0 0.0
        %415 = vmatprep.subr.mxu0 0.0
        %416 = vmatpush1.msra.mxu0 0.0
        %417 = vmatprep.subr.mxu0 0.0
        %418 = vmatpush1.msra.mxu0 0.0
        %419 = vmatprep.subr.mxu0 0.0
        %420 = vmatpush1.msra.mxu0 0.0
        %421 = vmatprep.subr.mxu0 0.0
        %422 = vmatpush1.msra.mxu0 0.0
        %423 = vmatprep.subr.mxu0 0.0
        %424 = vmatpush1.msra.mxu0 0.0
        %425 = vmatprep.subr.mxu0 0.0
        %426 = vmatpush1.msra.mxu0 0.0
        %427 = vmatprep.subr.mxu0 0.0
        %428 = vmatpush1.msra.mxu0 0.0
        %429 = vmatprep.subr.mxu0 0.0
        %430 = vmatpush1.msra.mxu0 0.0
        %431 = vmatprep.subr.mxu0 0.0
        %432 = vmatpush1.msra.mxu0 0.0
        %433 = vmatprep.subr.mxu0 0.0
        %434 = vmatpush1.msra.mxu0 0.0
        %435 = vmatprep.subr.mxu0 0.0
        %436 = vmatpush1.msra.mxu0 0.0
        %437 = vmatprep.subr.mxu0 0.0
        %438 = vmatpush1.msra.mxu0 0.0
        %439 = vmatprep.subr.mxu0 0.0
        %440 = vmatpush1.msra.mxu0 0.0
        %441 = vmatprep.subr.mxu0 0.0
        %442 = vmatpush1.msra.mxu0 0.0
        %443 = vmatprep.subr.mxu0 0.0
        %444 = vmatpush1.msra.mxu0 0.0
        %445 = vmatprep.subr.mxu0 0.0
        %446 = vmatpush1.msra.mxu0 0.0
        %447 = vmatprep.subr.mxu0 0.0
        %448 = vmatpush1.msra.mxu0 0.0
        %449 = vmatprep.subr.mxu0 0.0
        %450 = vmatpush1.msra.mxu0 0.0
        %451 = vmatprep.subr.mxu0 0.0
        %452 = vmatpush1.msra.mxu0 0.0
        %453 = vmatprep.subr.mxu0 0.0
        %454 = vmatpush1.msra.mxu0 0.0
        %455 = vmatprep.subr.mxu0 0.0
        %456 = vmatpush1.msra.mxu0 0.0
        %457 = vmatprep.subr.mxu0 0.0
        %458 = vmatpush1.msra.mxu0 0.0
        %459 = vmatprep.subr.mxu0 0.0
        %460 = vmatpush1.msra.mxu0 0.0
        %461 = vmatprep.subr.mxu0 0.0
        %462 = vmatpush1.msra.mxu0 0.0
        %463 = vmatprep.mubr.f32.mxu0 0.0
        %464 = vmatmul.mubr.f32.gmra.mrb[0].mxu0 %v394
        %v465 = vpop.f32.mrb[0].mxu0
        %v466 = vadd.f32 0.0, %v465
        %v467 = vpop.f32.mrb[0].mxu0
        %468 = vmatprep.mubr.f32.mxu0 0.0
        %469 = vmatmul.mubr.f32.gmra.mrb[0].mxu0 %v397
        %v470 = vpop.f32.mrb[0].mxu0
        %v471 = vadd.f32 0.0, %v470
        %v472 = vpop.f32.mrb[0].mxu0
        %473 = vdwg.mxu0
        %474 = vrot.lane.b32.xlu0 %v279, 112
        %v475 = vpop.permute.xlu0 %474
        %476 = vrot.lane.b32.xlu0 %v280, 112
        %v477 = vpop.permute.xlu0 %476
        %478 = vrot.lane.b32.xlu0 %v268, 112
        %v479 = vpop.permute.xlu0 %478
        %480 = vrot.lane.b32.xlu0 %v269, 112
        %v481 = vpop.permute.xlu0 %480
        %v482 = vsel %vm281, %v475, 0
        %v484 = vsel %vm281, %v477, 0
        %v486 = vsel %vm281, %v479, 0
        %v488 = vsel %vm281, %v481, 0
        %490 = vmatprep.subr.mxu0 0.0
        %491 = vmatpush1.xpose.msra.mxu0 %v486
        %492 = vmatprep.subr.mxu0 0.0
        %493 = vmatpush1.xpose.msra.mxu0 %v488
        %494 = vmatprep.subr.mxu0 0.0
        %495 = vmatpush1.xpose.msra.mxu0 0.0
        %496 = vmatprep.subr.mxu0 0.0
        %497 = vmatpush1.xpose.msra.mxu0 0.0
        %498 = vmatprep.subr.mxu0 0.0
        %499 = vmatpush1.xpose.msra.mxu0 0.0
        %500 = vmatprep.subr.mxu0 0.0
        %501 = vmatpush1.xpose.msra.mxu0 0.0
        %502 = vmatprep.subr.mxu0 0.0
        %503 = vmatpush1.xpose.msra.mxu0 0.0
        %504 = vmatprep.subr.mxu0 0.0
        %505 = vmatpush1.xpose.msra.mxu0 0.0
        %506 = vmatprep.subr.mxu0 0.0
        %507 = vmatpush1.xpose.msra.mxu0 0.0
        %508 = vmatprep.subr.mxu0 0.0
        %509 = vmatpush1.xpose.msra.mxu0 0.0
        %510 = vmatprep.subr.mxu0 0.0
        %511 = vmatpush1.xpose.msra.mxu0 0.0
        %512 = vmatprep.subr.mxu0 0.0
        %513 = vmatpush1.xpose.msra.mxu0 0.0
        %514 = vmatprep.subr.mxu0 0.0
        %515 = vmatpush1.xpose.msra.mxu0 0.0
        %516 = vmatprep.subr.mxu0 0.0
        %517 = vmatpush1.xpose.msra.mxu0 0.0
        %518 = vmatprep.subr.mxu0 0.0
        %519 = vmatpush1.xpose.msra.mxu0 0.0
        %520 = vmatprep.subr.mxu0 0.0
        %521 = vmatpush1.xpose.msra.mxu0 0.0
        %522 = vmatprep.subr.mxu0 0.0
        %523 = vmatpush1.xpose.msra.mxu0 0.0
        %524 = vmatprep.subr.mxu0 0.0
        %525 = vmatpush1.xpose.msra.mxu0 0.0
        %526 = vmatprep.subr.mxu0 0.0
        %527 = vmatpush1.xpose.msra.mxu0 0.0
        %528 = vmatprep.subr.mxu0 0.0
        %529 = vmatpush1.xpose.msra.mxu0 0.0
        %530 = vmatprep.subr.mxu0 0.0
        %531 = vmatpush1.xpose.msra.mxu0 0.0
        %532 = vmatprep.subr.mxu0 0.0
        %533 = vmatpush1.xpose.msra.mxu0 0.0
        %534 = vmatprep.subr.mxu0 0.0
        %535 = vmatpush1.xpose.msra.mxu0 0.0
        %536 = vmatprep.subr.mxu0 0.0
        %537 = vmatpush1.xpose.msra.mxu0 0.0
        %538 = vmatprep.subr.mxu0 0.0
        %539 = vmatpush1.xpose.msra.mxu0 0.0
        %540 = vmatprep.subr.mxu0 0.0
        %541 = vmatpush1.xpose.msra.mxu0 0.0
        %542 = vmatprep.subr.mxu0 0.0
        %543 = vmatpush1.xpose.msra.mxu0 0.0
        %544 = vmatprep.subr.mxu0 0.0
        %545 = vmatpush1.xpose.msra.mxu0 0.0
        %546 = vmatprep.subr.mxu0 0.0
        %547 = vmatpush1.xpose.msra.mxu0 0.0
        %548 = vmatprep.subr.mxu0 0.0
        %549 = vmatpush1.xpose.msra.mxu0 0.0
        %550 = vmatprep.subr.mxu0 0.0
        %551 = vmatpush1.xpose.msra.mxu0 0.0
        %552 = vmatprep.subr.mxu0 0.0
        %553 = vmatpush1.xpose.msra.mxu0 0.0
        %554 = vmatprep.mubr.f32.mxu0 0.0
        %555 = vmatmul.mubr.f32.gmra.mrb[0].mxu0 %v482
        %v556 = vpop.f32.mrb[0].mxu0
        %v557 = vadd.f32 0.0, %v556
        %v558 = vpop.f32.mrb[0].mxu0
        %559 = vmatprep.mubr.f32.mxu0 0.0
        %560 = vmatmul.mubr.f32.gmra.mrb[0].mxu0 %v484
        %v561 = vpop.f32.mrb[0].mxu0
        %v562 = vadd.f32 0.0, %v561
        %v563 = vpop.f32.mrb[0].mxu0
        %564 = vdwg.mxu0
        %v565 = vsel %vm277, %v557, -10000.0
        %v566 = vsel %vm278, %v562, -10000.0
        %v567 = vsel %vm281, %v565, -inf
        %568 = vmax.xlane.f32.xlu0 %v567
        %v569 = vpop.xlane.xlu0 %568
        %v570 = vsel %vm281, %v566, -inf
        %571 = vmax.xlane.f32.xlu0 %v570
        %v572 = vpop.xlane.xlu0 %571
        %v573 = vsub.f32 %v565, %v569
        %v574 = vsub.f32 %v566, %v572
        %v575 = vmul.f32 %v573, 1.442695
        %v576 = vpow.pop %v575
        %v577 = vmul.f32 %v574, 1.442695
        %v578 = vpow.pop %v577
        %v579 = vsel %vm281, %v576, 0.0
        %580 = vadd.xlane.f32.xlu0 %v579
        %v581 = vpop.xlane.xlu0 %580
        %v582 = vsel %vm281, %v578, 0.0
        %583 = vadd.xlane.f32.xlu0 %v582
        %v584 = vpop.xlane.xlu0 %583
        %v585 = vrcp.pop %v581
        %v586 = vmul.f32 %v576, %v585
        %v587 = vrcp.pop %v584
        %v588 = vmul.f32 %v578, %v587
        %591 = vrot.lane.b32.xlu0 %v270, 112
        %v592 = vpop.permute.xlu0 %591
        %593 = vrot.lane.b32.xlu0 %v271, 112
        %v594 = vpop.permute.xlu0 %593
        %v598 = vsel %vm281, %v586, 0
        %v601 = vsel %vm281, %v588, 0
        %603 = vmatprep.subr.mxu0 0.0
        %604 = vmatpush1.msra.mxu0 %v592
        %605 = vmatprep.subr.mxu0 0.0
        %606 = vmatpush1.msra.mxu0 %v594
        %607 = vmatprep.subr.mxu0 0.0
        %608 = vmatpush1.msra.mxu0 0.0
        %609 = vmatprep.subr.mxu0 0.0
        %610 = vmatpush1.msra.mxu0 0.0
        %611 = vmatprep.subr.mxu0 0.0
        %612 = vmatpush1.msra.mxu0 0.0
        %613 = vmatprep.subr.mxu0 0.0
        %614 = vmatpush1.msra.mxu0 0.0
        %615 = vmatprep.subr.mxu0 0.0
        %616 = vmatpush1.msra.mxu0 0.0
        %617 = vmatprep.subr.mxu0 0.0
        %618 = vmatpush1.msra.mxu0 0.0
        %619 = vmatprep.subr.mxu0 0.0
        %620 = vmatpush1.msra.mxu0 0.0
        %621 = vmatprep.subr.mxu0 0.0
        %622 = vmatpush1.msra.mxu0 0.0
        %623 = vmatprep.subr.mxu0 0.0
        %624 = vmatpush1.msra.mxu0 0.0
        %625 = vmatprep.subr.mxu0 0.0
        %626 = vmatpush1.msra.mxu0 0.0
        %627 = vmatprep.subr.mxu0 0.0
        %628 = vmatpush1.msra.mxu0 0.0
        %629 = vmatprep.subr.mxu0 0.0
        %630 = vmatpush1.msra.mxu0 0.0
        %631 = vmatprep.subr.mxu0 0.0
        %632 = vmatpush1.msra.mxu0 0.0
        %633 = vmatprep.subr.mxu0 0.0
        %634 = vmatpush1.msra.mxu0 0.0
        %635 = vmatprep.subr.mxu0 0.0
        %636 = vmatpush1.msra.mxu0 0.0
        %637 = vmatprep.subr.mxu0 0.0
        %638 = vmatpush1.msra.mxu0 0.0
        %639 = vmatprep.subr.mxu0 0.0
        %640 = vmatpush1.msra.mxu0 0.0
        %641 = vmatprep.subr.mxu0 0.0
        %642 = vmatpush1.msra.mxu0 0.0
        %643 = vmatprep.subr.mxu0 0.0
        %644 = vmatpush1.msra.mxu0 0.0
        %645 = vmatprep.subr.mxu0 0.0
        %646 = vmatpush1.msra.mxu0 0.0
        %647 = vmatprep.subr.mxu0 0.0
        %648 = vmatpush1.msra.mxu0 0.0
        %649 = vmatprep.subr.mxu0 0.0
        %650 = vmatpush1.msra.mxu0 0.0
        %651 = vmatprep.subr.mxu0 0.0
        %652 = vmatpush1.msra.mxu0 0.0
        %653 = vmatprep.subr.mxu0 0.0
        %654 = vmatpush1.msra.mxu0 0.0
        %655 = vmatprep.subr.mxu0 0.0
        %656 = vmatpush1.msra.mxu0 0.0
        %657 = vmatprep.subr.mxu0 0.0
        %658 = vmatpush1.msra.mxu0 0.0
        %659 = vmatprep.subr.mxu0 0.0
        %660 = vmatpush1.msra.mxu0 0.0
        %661 = vmatprep.subr.mxu0 0.0
        %662 = vmatpush1.msra.mxu0 0.0
        %663 = vmatprep.subr.mxu0 0.0
        %664 = vmatpush1.msra.mxu0 0.0
        %665 = vmatprep.subr.mxu0 0.0
        %666 = vmatpush1.msra.mxu0 0.0
        %667 = vmatprep.mubr.f32.mxu0 0.0
        %668 = vmatmul.mubr.f32.gmra.mrb[0].mxu0 %v598
        %v669 = vpop.f32.mrb[0].mxu0
        %v670 = vadd.f32 0.0, %v669
        %v671 = vpop.f32.mrb[0].mxu0
        %672 = vmatprep.mubr.f32.mxu0 0.0
        %673 = vmatmul.mubr.f32.gmra.mrb[0].mxu0 %v601
        %v674 = vpop.f32.mrb[0].mxu0
        %v675 = vadd.f32 0.0, %v674
        %v676 = vpop.f32.mrb[0].mxu0
        %677 = vdwg.mxu0
        %680 = vrot.lane.b32.xlu0 %v670, 16
        %v681 = vpop.permute.xlu0 %680
        %682 = vrot.lane.b32.xlu0 %v675, 16
        %v683 = vpop.permute.xlu0 %682
        %v686 = vsel %vm281, %v466, %v681
        %v687 = vsel %vm281, %v471, %v683
        %vm688 = vcmask 261120
        %689 = vst.msk [vmem:[%s265] sm:$0xff] %vm688, %v686
        %690 = vst.msk [vmem:[%s265 + $0x8] sm:$0xff] %vm688, %v687
        %s691 = sand.u32 %s109, 1
        %s692 = scalar_lea.sflag [#allocation4], %s691
        %s693 = sand.u32 %s109, 1
        %s694 = smul.addr %s693, 16
        %s695 = scalar_lea.vmem [#allocation8], %s694
        // Predicated region
        $region45: #{fft_forward.21} parent=31 // pred_check
          %p696 = pneg %p119
        $region46: #{fft_forward.21} parent=31 // pred_check_branch
          %698 = sbr.rel (%p696) target = $region48
        $region47: #{fft_forward.21} parent=31 // pred_region
          %s700 = ssub.s32 256, 256
          %701 = vsyncadd %s692, %s700
          %s702 = smul.addr %s23, 2
          %s703 = smul.addr %s702, 128
          %s704 = scalar_lea.hbm %s3, %s703
          %s705 = sshll.u32 %s695, 4
          %s706 = int_to_ptr.vmem [resolvable:$true] %s705
          %711 = dma.vmem_to_hbm [thread:$0]  %s706, 256, %s704, %s692, 128, 128, 8
        $region48: #{fft_forward.21} parent=31 // pred_fallthru
          _
      $region32: #{fft_forward.21} parent=5 // pred_fallthru
        _
      %p712 = scmp.le.s32.totalorder 2, %s18
      // Predicated region
      $region49: #{fft_forward.21} parent=5 // pred_check
        %p713 = pneg %p712
      $region50: #{fft_forward.21} parent=5 // pred_check_branch
        %715 = sbr.rel (%p713) target = $region52
      $region51: #{fft_forward.21} parent=5 // pred_region
        %s716 = ssub.s32 %s18, 2
        // Predicated region
        $region53: #{fft_forward.21} parent=51 // pred_check
          %p717 = pneg %p125
        $region54: #{fft_forward.21} parent=51 // pred_check_branch
          %719 = sbr.rel (%p717) target = $region56
        $region55: #{fft_forward.21} parent=51 // pred_region
          %s720 = sand.u32 %s110, 1
          %s721 = scalar_lea.sflag [#allocation4], %s720
          %s722 = sand.u32 %s110, 1
          %s723 = smul.addr %s722, 16
          %s724 = scalar_lea.vmem [#allocation8], %s723
          %725 = dma.done %s721, 256
        $region56: #{fft_forward.21} parent=51 // pred_fallthru
          _
      $region52: #{fft_forward.21} parent=5 // pred_fallthru
        _
    $region6: #{fft_forward.21} parent=1 // loop_footer
      %s22 = sadd.s32 1, %s18
    $region7: #{fft_forward.21} parent=1 // loop_footer_branch
      %17 = sbr.rel target = $region3
    $region8: #{fft_forward.21} parent=1 // loop_exit
      _
    %726 = vsyncpa [#allocation3], 1
    %s727 = scalar_lea.sflag [#allocation3], 1
    %728 = vsyncpa %s727, 1
    %729 = vsyncpa [#allocation6], 1
    %s730 = scalar_lea.sflag [#allocation6], 1
    %731 = vsyncpa %s730, 1
    %732 = vsyncpa [#allocation4], 1
    %s733 = scalar_lea.sflag [#allocation4], 1
    %734 = vsyncpa %s733, 1

// kernel: fft_forward.25
$region0: #{fft_forward.25}
  #allocation0 [shape = 'u32[]', space=smem, size = 0x4, offset = 0x4, fixed_abs, tag = 'smem constant byte address 0x4 - core index']
  #allocation1 [shape = 'u32[144,128]{1,0:T(1,128)}', space=vmem, size = 0x12000, scoped, tag = 'internal scratch']
  %s0 = inlined_call_operand.hbm [shape: f32[32,192], index: 0, kind: input, shape index: {}]
  %s1 = inlined_call_operand.hbm [shape: f32[192,32], index: 1, kind: input, shape index: {}]
  %s2 = inlined_call_operand.hbm [shape: f32[1,32], index: 2, kind: input, shape index: {}]
  %s3 = inlined_call_operand.hbm [shape: f32[32,32], index: 3, kind: output, shape index: {}]
  %s4 = sld [smem:[#allocation0]]
  $region34: #{fft_forward.25} parent=0
    _
  %s6 = ssub.s32 1, %s4
  %s7 = scalar_select 0, %s6, %s4
  $region1: #{fft_forward.25} parent=0
    #allocation2 [shape = 'u8[32768]{0}', space=vmem, size = 0x8000, scoped, tag = 'input window, operand 0, single buffered']
    #allocation3 [shape = 's32[1]{0}', space=sflag, size = 0x4, scoped, tag = 'scoped memory for fft_forward.25']
    #allocation4 [shape = 's32[1]{0}', space=sflag, size = 0x4, scoped, tag = 'scoped memory for fft_forward.25']
    #allocation5 [shape = 'u8[98304]{0}', space=vmem, size = 0x18000, scoped, tag = 'input window, operand 1, single buffered']
    #allocation6 [shape = 's32[1]{0}', space=sflag, size = 0x4, scoped, tag = 'scoped memory for fft_forward.25']
    #allocation7 [shape = 'u8[512]{0}', space=vmem, size = 0x400, scoped, tag = 'input window, operand 2, single buffered']
    #allocation8 [shape = 'u8[16384]{0}', space=vmem, size = 0x4000, scoped, tag = 'output window, operand 0, single buffered']
    %8 = vsyncpa [#allocation3], 0
    %9 = vsyncpa [#allocation6], 0
    %10 = vsyncpa [#allocation4], 0
    // Predicated region
    $region2: #{fft_forward.25} parent=1 // pred_check
      _
    $region3: #{fft_forward.25} parent=1 // pred_check_branch
      %12 = sbr.rel (0) target = $region5
    $region4: #{fft_forward.25} parent=1 // pred_region
      %s14 = ssub.s32 1024, 1024
      %15 = vsyncadd [#allocation3], %s14
      %s16 = sshll.u32 [#allocation2], 4
      %s17 = int_to_ptr.vmem [resolvable:$true] %s16
      %22 = dma.hbm_to_vmem [thread:$0]  %s0, 1024, %s17, [#allocation3], 256, 256, 16
    $region5: #{fft_forward.25} parent=1 // pred_fallthru
      _
    // Predicated region
    $region6: #{fft_forward.25} parent=1 // pred_check
      _
    $region7: #{fft_forward.25} parent=1 // pred_check_branch
      %24 = sbr.rel (0) target = $region9
    $region8: #{fft_forward.25} parent=1 // pred_region
      %s26 = ssub.s32 3072, 3072
      %27 = vsyncadd [#allocation6], %s26
      %s28 = sshll.u32 [#allocation5], 4
      %s29 = int_to_ptr.vmem [resolvable:$true] %s28
      %34 = dma.hbm_to_vmem [thread:$0]  %s1, 3072, %s29, [#allocation6], 128, 128, 8
    $region9: #{fft_forward.25} parent=1 // pred_fallthru
      _
    // Predicated region
    $region10: #{fft_forward.25} parent=1 // pred_check
      _
    $region11: #{fft_forward.25} parent=1 // pred_check_branch
      %36 = sbr.rel (0) target = $region13
    $region12: #{fft_forward.25} parent=1 // pred_region
      %s38 = ssub.s32 16, 16
      %39 = vsyncadd [#allocation6], %s38
      %s41 = sshll.u32 [#allocation7], 4
      %s42 = int_to_ptr.vmem [resolvable:$true] %s41
      %44 = dma.hbm_to_vmem [thread:$0]  %s2, 16, %s42, [#allocation6]
    $region13: #{fft_forward.25} parent=1 // pred_fallthru
      _
    // Predicated region
    $region14: #{fft_forward.25} parent=1 // pred_check
      _
    $region15: #{fft_forward.25} parent=1 // pred_check_branch
      %46 = sbr.rel (0) target = $region17
    $region16: #{fft_forward.25} parent=1 // pred_region
      %47 = dma.done [#allocation3], 1024
    $region17: #{fft_forward.25} parent=1 // pred_fallthru
      _
    // Predicated region
    $region18: #{fft_forward.25} parent=1 // pred_check
      _
    $region19: #{fft_forward.25} parent=1 // pred_check_branch
      %49 = sbr.rel (0) target = $region21
    $region20: #{fft_forward.25} parent=1 // pred_region
      %50 = dma.done [#allocation6], 3072
    $region21: #{fft_forward.25} parent=1 // pred_fallthru
      _
    // Predicated region
    $region22: #{fft_forward.25} parent=1 // pred_check
      _
    $region23: #{fft_forward.25} parent=1 // pred_check_branch
      %52 = sbr.rel (0) target = $region25
    $region24: #{fft_forward.25} parent=1 // pred_region
      %53 = dma.done [#allocation6], 16
    $region25: #{fft_forward.25} parent=1 // pred_fallthru
      _
    %v54 = vld [vmem:[#allocation2] sm:$0xff]
    %v55 = vld [vmem:[#allocation2 + $0x8] sm:$0xff]
    %v56 = vld [vmem:[#allocation2 + $0x10] sm:$0xff]
    %v57 = vld [vmem:[#allocation2 + $0x18] sm:$0xff]
    %v58 = vld [vmem:[#allocation2 + $0x20] sm:$0xff]
    %v59 = vld [vmem:[#allocation2 + $0x28] sm:$0xff]
    %v60 = vld [vmem:[#allocation2 + $0x30] sm:$0xff]
    %v61 = vld [vmem:[#allocation2 + $0x38] sm:$0xff]
    %v62 = vld [vmem:[#allocation5] sm:$0xff]
    %v63 = vld [vmem:[#allocation5 + $0x8] sm:$0xff]
    %v64 = vld [vmem:[#allocation5 + $0x10] sm:$0xff]
    %v65 = vld [vmem:[#allocation5 + $0x18] sm:$0xff]
    %v66 = vld [vmem:[#allocation5 + $0x20] sm:$0xff]
    %v67 = vld [vmem:[#allocation5 + $0x28] sm:$0xff]
    %v68 = vld [vmem:[#allocation5 + $0x30] sm:$0xff]
    %v69 = vld [vmem:[#allocation5 + $0x38] sm:$0xff]
    %v70 = vld [vmem:[#allocation5 + $0x40] sm:$0xff]
    %v71 = vld [vmem:[#allocation5 + $0x48] sm:$0xff]
    %v72 = vld [vmem:[#allocation5 + $0x50] sm:$0xff]
    %v73 = vld [vmem:[#allocation5 + $0x58] sm:$0xff]
    %v74 = vld [vmem:[#allocation5 + $0x60] sm:$0xff]
    %v75 = vld [vmem:[#allocation5 + $0x68] sm:$0xff]
    %v76 = vld [vmem:[#allocation5 + $0x70] sm:$0xff]
    %v77 = vld [vmem:[#allocation5 + $0x78] sm:$0xff]
    %v78 = vld [vmem:[#allocation5 + $0x80] sm:$0xff]
    %v79 = vld [vmem:[#allocation5 + $0x88] sm:$0xff]
    %v80 = vld [vmem:[#allocation5 + $0x90] sm:$0xff]
    %v81 = vld [vmem:[#allocation5 + $0x98] sm:$0xff]
    %v82 = vld [vmem:[#allocation5 + $0xa0] sm:$0xff]
    %v83 = vld [vmem:[#allocation5 + $0xa8] sm:$0xff]
    %v84 = vld [vmem:[#allocation5 + $0xb0] sm:$0xff]
    %v85 = vld [vmem:[#allocation5 + $0xb8] sm:$0xff]
    %v86 = vld [vmem:[#allocation7] sm:$0x1]
    %v88 = vlaneseq
    %v89 = vshrl.u32 %v88, 7
    %v90 = vsub.s32 0, %v89
    %v91 = vrot.slane %v86, %v90
    %vm93 = vcmask 523264
    %v95 = vsel %vm93, %v55, 0
    %v98 = vsel %vm93, %v57, 0
    %v101 = vsel %vm93, %v59, 0
    %v104 = vsel %vm93, %v61, 0
    %106 = vmatprep.subr.mxu0 0.0
    %107 = vmatpush1.msra.mxu0 %v62
    %108 = vmatprep.subr.mxu0 0.0
    %109 = vmatpush1.msra.mxu0 %v63
    %110 = vmatprep.subr.mxu0 0.0
    %111 = vmatpush1.msra.mxu0 %v64
    %112 = vmatprep.subr.mxu0 0.0
    %113 = vmatpush1.msra.mxu0 %v65
    %114 = vmatprep.subr.mxu0 0.0
    %115 = vmatpush1.msra.mxu0 %v66
    %116 = vmatprep.subr.mxu0 0.0
    %117 = vmatpush1.msra.mxu0 %v67
    %118 = vmatprep.subr.mxu0 0.0
    %119 = vmatpush1.msra.mxu0 %v68
    %120 = vmatprep.subr.mxu0 0.0
    %121 = vmatpush1.msra.mxu0 %v69
    %122 = vmatprep.subr.mxu0 0.0
    %123 = vmatpush1.msra.mxu0 %v70
    %124 = vmatprep.subr.mxu0 0.0
    %125 = vmatpush1.msra.mxu0 %v71
    %126 = vmatprep.subr.mxu0 0.0
    %127 = vmatpush1.msra.mxu0 %v72
    %128 = vmatprep.subr.mxu0 0.0
    %129 = vmatpush1.msra.mxu0 %v73
    %130 = vmatprep.subr.mxu0 0.0
    %131 = vmatpush1.msra.mxu0 %v74
    %132 = vmatprep.subr.mxu0 0.0
    %133 = vmatpush1.msra.mxu0 %v75
    %134 = vmatprep.subr.mxu0 0.0
    %135 = vmatpush1.msra.mxu0 %v76
    %136 = vmatprep.subr.mxu0 0.0
    %137 = vmatpush1.msra.mxu0 %v77
    %138 = vmatprep.subr.mxu0 0.0
    %139 = vmatpush1.msra.mxu0 %v78
    %140 = vmatprep.subr.mxu0 0.0
    %141 = vmatpush1.msra.mxu0 %v79
    %142 = vmatprep.subr.mxu0 0.0
    %143 = vmatpush1.msra.mxu0 %v80
    %144 = vmatprep.subr.mxu0 0.0
    %145 = vmatpush1.msra.mxu0 %v81
    %146 = vmatprep.subr.mxu0 0.0
    %147 = vmatpush1.msra.mxu0 %v82
    %148 = vmatprep.subr.mxu0 0.0
    %149 = vmatpush1.msra.mxu0 %v83
    %150 = vmatprep.subr.mxu0 0.0
    %151 = vmatpush1.msra.mxu0 %v84
    %152 = vmatprep.subr.mxu0 0.0
    %153 = vmatpush1.msra.mxu0 %v85
    %154 = vmatprep.subr.mxu0 0.0
    %155 = vmatpush1.msra.mxu0 0.0
    %156 = vmatprep.subr.mxu0 0.0
    %157 = vmatpush1.msra.mxu0 0.0
    %158 = vmatprep.subr.mxu0 0.0
    %159 = vmatpush1.msra.mxu0 0.0
    %160 = vmatprep.subr.mxu0 0.0
    %161 = vmatpush1.msra.mxu0 0.0
    %162 = vmatprep.subr.mxu0 0.0
    %163 = vmatpush1.msra.mxu0 0.0
    %164 = vmatprep.subr.mxu0 0.0
    %165 = vmatpush1.msra.mxu0 0.0
    %166 = vmatprep.subr.mxu0 0.0
    %167 = vmatpush1.msra.mxu0 0.0
    %168 = vmatprep.subr.mxu0 0.0
    %169 = vmatpush1.msra.mxu0 0.0
    %170 = vmatprep.mubr.f32.mxu0 %v95
    %171 = vmatmul.mubr.f32.gmra.mrb[0].mxu0 %v54
    %v172 = vpop.f32.mrb[0].mxu0
    %v173 = vadd.f32 %v91, %v172
    %v174 = vpop.f32.mrb[0].mxu0
    %175 = vmatprep.mubr.f32.mxu0 %v98
    %176 = vmatmul.mubr.f32.gmra.mrb[0].mxu0 %v56
    %v177 = vpop.f32.mrb[0].mxu0
    %v178 = vadd.f32 %v91, %v177
    %v179 = vpop.f32.mrb[0].mxu0
    %180 = vmatprep.mubr.f32.mxu0 %v101
    %181 = vmatmul.mubr.f32.gmra.mrb[0].mxu0 %v58
    %v182 = vpop.f32.mrb[0].mxu0
    %v183 = vadd.f32 %v91, %v182
    %v184 = vpop.f32.mrb[0].mxu0
    %185 = vmatprep.mubr.f32.mxu0 %v104
    %186 = vmatmul.mubr.f32.gmra.mrb[0].mxu0 %v60
    %v187 = vpop.f32.mrb[0].mxu0
    %v188 = vadd.f32 %v91, %v187
    %v189 = vpop.f32.mrb[0].mxu0
    %190 = vdwg.mxu0
    %vm191 = vcmask 261120
    %192 = vst.msk [vmem:[#allocation8] sm:$0xff] %vm191, %v173
    %193 = vst.msk [vmem:[#allocation8 + $0x8] sm:$0xff] %vm191, %v178
    %194 = vst.msk [vmem:[#allocation8 + $0x10] sm:$0xff] %vm191, %v183
    %195 = vst.msk [vmem:[#allocation8 + $0x18] sm:$0xff] %vm191, %v188
    // Predicated region
    $region26: #{fft_forward.25} parent=1 // pred_check
      _
    $region27: #{fft_forward.25} parent=1 // pred_check_branch
      %197 = sbr.rel (0) target = $region29
    $region28: #{fft_forward.25} parent=1 // pred_region
      %s199 = ssub.s32 512, 512
      %200 = vsyncadd [#allocation4], %s199
      %s201 = sshll.u32 [#allocation8], 4
      %s202 = int_to_ptr.vmem [resolvable:$true] %s201
      %207 = dma.vmem_to_hbm [thread:$0]  %s202, 512, %s3, [#allocation4], 128, 128, 8
    $region29: #{fft_forward.25} parent=1 // pred_fallthru
      _
    // Predicated region
    $region30: #{fft_forward.25} parent=1 // pred_check
      _
    $region31: #{fft_forward.25} parent=1 // pred_check_branch
      %209 = sbr.rel (0) target = $region33
    $region32: #{fft_forward.25} parent=1 // pred_region
      %210 = dma.done [#allocation4], 512
    $region33: #{fft_forward.25} parent=1 // pred_fallthru
      _
    %211 = vsyncpa [#allocation3], 1
    %212 = vsyncpa [#allocation6], 1
    %213 = vsyncpa [#allocation4], 1

</llo_original>
